<compile_context>
chip_gen: v6e
topology: v6e:2x2x1
jax: 0.10.0
libtpu: 0.0.40
codegen_flags: <defaults>
</compile_context>

<pallas_src>
import numpy as np

import jax
import jax.numpy as jnp
from jax.experimental import pallas as pl
from jax.experimental.pallas import tpu as pltpu


def _round_up(x, m):
    return (x + m - 1) // m * m


# ----------------------------------------------------------------------------
# Fused kernel: tap-sum + pool + tanh (conv layer 1), banded block-diagonal
# matmul (conv layer 2) + pool + tanh, per-branch Linear+ReLU, final Linear +
# log_softmax.  Weights are VMEM-resident across grid steps; the batch axis is
# the (parallel) grid.
# ----------------------------------------------------------------------------
def _make_cnn_kernel(filter_sizes):
    nb = len(filter_sizes)

    def kernel(v_ref, c1_ref, m2_ref, c2_ref, w3_ref, c3_ref, w4_ref, c4_ref,
               out_ref, p1_ref):
        h2 = m2_ref.shape[1] // 2          # padded pooled width of conv layer 2
        blk = p1_ref.shape[1] // nb        # 128 lanes per branch block

        # ---- conv layer 1: the wrapper gathered, per (branch, parity, tap),
        # the per-token projections P[token] as (TB, 128) tiles.  Summing the
        # taps gives the conv output at even / odd positions; MaxPool1d(2,2)
        # is the elementwise max of the two groups (pool BEFORE tanh).
        row = 0
        for i, fs in enumerate(filter_sizes):
            even = v_ref[row].astype(jnp.float32)
            for j in range(1, fs):
                even = even + v_ref[row + j].astype(jnp.float32)
            row += fs
            odd = v_ref[row].astype(jnp.float32)
            for j in range(1, fs):
                odd = odd + v_ref[row + j].astype(jnp.float32)
            row += fs
            p1_ref[:, i * blk:(i + 1) * blk] = jnp.tanh(
                jnp.maximum(even, odd) + c1_ref[:, i * blk:(i + 1) * blk])

        # ---- conv layer 2: banded block-diagonal matmul with pool-permuted
        # [even | odd] columns, then pool (aligned half-slice max) then tanh.
        a2 = jnp.dot(p1_ref[...].astype(jnp.bfloat16), m2_ref[...],
                     preferred_element_type=jnp.float32) + c2_ref[...]
        p2 = jnp.tanh(jnp.maximum(a2[:, :h2], a2[:, h2:]))

        # ---- per-branch Linear(u2 -> 32) + ReLU, packed block-diagonal -> (TB, 128)
        f = jnp.maximum(
            jnp.dot(p2.astype(jnp.bfloat16), w3_ref[...],
                    preferred_element_type=jnp.float32) + c3_ref[...], 0.0)

        # ---- final Linear(128 -> num_classes) + log_softmax(dim=1)
        logits = jnp.dot(f.astype(jnp.bfloat16), w4_ref[...],
                         preferred_element_type=jnp.float32) + c4_ref[...]
        m = jnp.max(logits, axis=1, keepdims=True)
        s = logits - m
        lse = jnp.log(jnp.sum(jnp.exp(s), axis=1, keepdims=True))
        out_ref[...] = (s - lse).astype(out_ref.dtype)

    return kernel


def forward(params, x_tokens, *, block_b=128):
    """x_tokens: (B, max_len_text) int32 token ids -> (B, num_classes) log-probs.

    block_b: batch tile (rows per grid step). 128 fills the v5e MXU exactly;
    256 is a good choice on v6e/v7x at large batch.
    """
    B = x_tokens.shape[0]
    TB = min(_round_up(block_b, 16), _round_up(B, 16))
    Bp = _round_up(B, TB)
    if Bp != B:
        x_tokens = jnp.pad(x_tokens, ((0, Bp - B), (0, 0)))

    # TODO(synk): the token -> tap-projection gather (the nn.Embedding lookup,
    # folded into the tiny (vocab x 14) table P) stays in plain JAX/XLA; there
    # is no clean single-kernel Pallas gather for this lookup pattern.
    tok = x_tokens[:, params["gather_pos"]]                       # (Bp, 2T, 128)
    v = params["P"][tok, params["gather_col"][None, :, None]]     # (Bp, 2T, 128)
    v = (v * params["gather_mask"][None]).astype(jnp.bfloat16)
    v = jnp.transpose(v, (1, 0, 2))                               # (2T, Bp, 128)

    n_rows, _, lane = v.shape
    num_classes = params["W4"].shape[1]
    kernel = _make_cnn_kernel(params["filter_sizes"])

    out = pl.pallas_call(
        kernel,
        out_shape=jax.ShapeDtypeStruct((Bp, num_classes), jnp.float32),
        grid_spec=pltpu.PrefetchScalarGridSpec(
            num_scalar_prefetch=0,
            grid=(Bp // TB,),
            in_specs=[
                # activation stream: tiled along the batch axis
                pl.BlockSpec((n_rows, TB, lane), lambda i: (0, i, 0)),
                # weights/biases: full blocks, constant index_map -> DMA'd once,
                # VMEM-resident across all grid steps
                pl.BlockSpec(params["c1"].shape, lambda i: (0, 0)),
                pl.BlockSpec(params["M2"].shape, lambda i: (0, 0)),
                pl.BlockSpec(params["c2"].shape, lambda i: (0, 0)),
                pl.BlockSpec(params["W3"].shape, lambda i: (0, 0)),
                pl.BlockSpec(params["c3"].shape, lambda i: (0, 0)),
                pl.BlockSpec(params["W4"].shape, lambda i: (0, 0)),
                pl.BlockSpec(params["c4"].shape, lambda i: (0, 0)),
            ],
            out_specs=pl.BlockSpec((TB, num_classes), lambda i: (i, 0)),
            scratch_shapes=[pltpu.VMEM((TB, params["c1"].shape[1]),
                                       jnp.float32)],
        ),
        compiler_params=pltpu.CompilerParams(
            dimension_semantics=("parallel",),
            vmem_limit_bytes=24 * 1024 * 1024),
    )(v, params["c1"], params["M2"], params["c2"],
      params["W3"], params["c3"], params["W4"], params["c4"])
    return out[:B]


# ----------------------------------------------------------------------------
# Raw (PyTorch-layout) parameters and their repacking into kernel operands.
# ----------------------------------------------------------------------------
def init_raw_params(key, vocab, emb_dim, filter_sizes, max_len, num_classes):
    E = emb_dim
    nb = len(filter_sizes)
    U1 = [(max_len + fs - 1) // 2 for fs in filter_sizes]
    U2 = [(u1 + fs - 1) // 2 for u1, fs in zip(U1, filter_sizes)]
    keys = iter(jax.random.split(key, 3 + 6 * nb))
    raw = {"embedding": jax.random.normal(next(keys), (vocab, E), jnp.float32),
           "w1": [], "b1": [], "w2": [], "b2": [], "Wl": [], "bl": []}
    for i, fs in enumerate(filter_sizes):
        k1 = 1.0 / np.sqrt(fs * E)
        raw["w1"].append(jax.random.uniform(next(keys), (fs * E,), jnp.float32, -k1, k1))
        raw["b1"].append(jax.random.uniform(next(keys), (), jnp.float32, -k1, k1))
        k2 = 1.0 / np.sqrt(fs)
        raw["w2"].append(jax.random.uniform(next(keys), (fs,), jnp.float32, -k2, k2))
        raw["b2"].append(jax.random.uniform(next(keys), (), jnp.float32, -k2, k2))
        kl = 1.0 / np.sqrt(U2[i])
        raw["Wl"].append(jax.random.uniform(next(keys), (32, U2[i]), jnp.float32, -kl, kl))
        raw["bl"].append(jax.random.uniform(next(keys), (32,), jnp.float32, -kl, kl))
    kf = 1.0 / np.sqrt(32 * nb)
    raw["Wf"] = jax.random.uniform(next(keys), (num_classes, 32 * nb), jnp.float32, -kf, kf)
    raw["bf"] = jax.random.uniform(next(keys), (num_classes,), jnp.float32, -kf, kf)
    return raw


def build_dense_params(raw, max_len, emb_dim, filter_sizes):
    """Repack PyTorch-layout weights into kernel operands:

      P            (vocab, T)      per-(branch,tap) token projections, T = sum(fs)
      gather_*     host-side gather plan (token position / P column / validity)
                   for every (branch, output-parity, tap) x pooled-lane combo
      c1           (1, 4*128) f32  conv-1 bias per branch block
      M2, c2       (4*128, 512)    conv-2 banded block-diagonal matrix with
                                   pool-permuted [even|odd] columns (bf16 / f32)
      W3, c3       (256, 128)      per-branch Linear(u2->32), block-diagonal (bf16)
      W4, c4       (128, C)        final Linear (bf16)
    """
    L, E = max_len, emb_dim
    nb = len(filter_sizes)
    BLK = 128                                    # per-branch pooled-conv1 lanes
    U1 = [(L + fs - 1) // 2 for fs in filter_sizes]
    U2 = [(u1 + fs - 1) // 2 for u1, fs in zip(U1, filter_sizes)]
    assert max(U1) <= BLK
    H2 = sum(U2)
    H2p = _round_up(H2, 128)
    F = 32 * nb
    T = sum(filter_sizes)
    cumfs = np.concatenate([[0], np.cumsum(filter_sizes)]).astype(np.int64)

    emb = np.asarray(raw["embedding"], np.float32)               # (vocab, E)

    # Per-tap conv-1 projection table: P[v, cumfs[i]+j] = emb[v] . w1_i[jE:(j+1)E]
    Wtap = np.zeros((E, T), np.float32)
    for i, fs in enumerate(filter_sizes):
        w1 = np.asarray(raw["w1"][i], np.float32)
        for j in range(fs):
            Wtap[:, cumfs[i] + j] = w1[j * E:(j + 1) * E]
    P = emb @ Wtap                                               # (vocab, T)

    # Gather plan + conv-1 bias, pool-permuted (even outputs then odd outputs,
    # per branch); lanes >= U1[i] and out-of-range conv padding taps are masked.
    n_rows = 2 * T
    gather_pos = np.zeros((n_rows, BLK), np.int32)
    gather_col = np.zeros((n_rows,), np.int32)
    gather_mask = np.zeros((n_rows, BLK), np.float32)
    c1 = np.zeros((1, nb * BLK), np.float32)
    for i, fs in enumerate(filter_sizes):
        c1[0, i * BLK:i * BLK + U1[i]] = float(raw["b1"][i])
        for p in range(2):                                       # 0: even, 1: odd
            for j in range(fs):
                k = 2 * cumfs[i] + p * fs + j
                gather_col[k] = cumfs[i] + j
                for u in range(U1[i]):
                    s = 2 * u + p + j - fs + 1                   # source token pos
                    if 0 <= s < L:
                        gather_pos[k, u] = s
                        gather_mask[k, u] = 1.0

    # Conv layer 2 as a banded block-diagonal matrix (rows at 128-aligned branch
    # offsets, pool-permuted columns), plus block-diagonal Linear(u2 -> 32).
    M2 = np.zeros((nb * BLK, 2 * H2p), np.float32)
    c2 = np.zeros((1, 2 * H2p), np.float32)
    W3 = np.zeros((H2p, F), np.float32)
    c3 = np.zeros((1, F), np.float32)
    off2 = 0
    for i, fs in enumerate(filter_sizes):
        u1, u2 = U1[i], U2[i]
        w2 = np.asarray(raw["w2"][i], np.float32)
        b2 = float(raw["b2"][i])
        for p in range(2):
            base = p * H2p + off2
            for u in range(u2):
                t = 2 * u + p
                col = base + u
                for j in range(fs):
                    s = t + j - fs + 1
                    if 0 <= s < u1:
                        M2[i * BLK + s, col] = w2[j]
                c2[0, col] = b2
        W3[off2:off2 + u2, 32 * i:32 * (i + 1)] = np.asarray(raw["Wl"][i], np.float32).T
        c3[0, 32 * i:32 * (i + 1)] = np.asarray(raw["bl"][i], np.float32)
        off2 += u2

    return {
        "filter_sizes": tuple(int(f) for f in filter_sizes),
        "P": jnp.asarray(P),
        "gather_pos": gather_pos,
        "gather_col": gather_col,
        "gather_mask": gather_mask,
        "c1": jnp.asarray(c1),
        "M2": jnp.asarray(M2, dtype=jnp.bfloat16), "c2": jnp.asarray(c2),
        "W3": jnp.asarray(W3, dtype=jnp.bfloat16), "c3": jnp.asarray(c3),
        "W4": jnp.asarray(np.asarray(raw["Wf"], np.float32).T, dtype=jnp.bfloat16),
        "c4": jnp.asarray(np.asarray(raw["bf"], np.float32).reshape(1, -1)),
    }


# ----------------------------------------------------------------------------
# Pure-JAX reference mirroring the PyTorch module literally (eval mode).
# ----------------------------------------------------------------------------
def forward_ref(raw, x_tokens, emb_dim, filter_sizes):
    B = x_tokens.shape[0]
    E = emb_dim
    emb = jnp.take(raw["embedding"], x_tokens, axis=0)
    x = emb.reshape(B, 1, -1)                                    # (B, 1, L*E)

    def conv1d(inp, w, b, stride, pad):
        o = jax.lax.conv_general_dilated(
            inp, w, window_strides=(stride,), padding=[(pad, pad)],
            dimension_numbers=("NCH", "OIH", "NCH"))
        return o + b.reshape(1, 1, 1)

    def maxpool2(inp):
        return jax.lax.reduce_window(inp, -jnp.inf, jax.lax.max,
                                     (1, 1, 2), (1, 1, 2), "VALID")

    feats = []
    for i, fs in enumerate(filter_sizes):
        w1 = jnp.asarray(raw["w1"][i]).reshape(1, 1, fs * E)
        o = maxpool2(jnp.tanh(conv1d(x, w1, raw["b1"][i], E, (fs - 1) * E)))
        w2 = jnp.asarray(raw["w2"][i]).reshape(1, 1, fs)
        o = maxpool2(jnp.tanh(conv1d(o, w2, raw["b2"][i], 1, fs - 1)))
        o = o.reshape(B, -1)
        feats.append(jnp.maximum(o @ raw["Wl"][i].T + raw["bl"][i], 0.0))

    f = jnp.concatenate(feats, axis=1)                           # (B, 128)
    logits = f @ raw["Wf"].T + raw["bf"]
    return jax.nn.log_softmax(logits, axis=1)


if __name__ == "__main__":
    VOCAB = 30
    EMB = 8
    FILTER_SIZES = (2, 3, 4, 5)   # forced by the hard-coded Linear(50/51/52/53, 32)
    NUM_CLASSES = 5
    MAX_LEN = 200                 # forced by the same hard-coded layer sizes
    BATCH = 2

    key = jax.random.PRNGKey(0)
    pkey, xkey = jax.random.split(key)
    raw = init_raw_params(pkey, VOCAB, EMB, FILTER_SIZES, MAX_LEN, NUM_CLASSES)
    dense = build_dense_params(raw, MAX_LEN, EMB, FILTER_SIZES)
    x = jax.random.randint(xkey, (BATCH, MAX_LEN), 0, VOCAB, dtype=jnp.int32)

    fwd = jax.jit(lambda tok: forward(dense, tok))
    out = jax.block_until_ready(fwd(x))

    ref = jax.block_until_ready(forward_ref(raw, x, EMB, FILTER_SIZES))
    assert out.shape == (BATCH, NUM_CLASSES)
    assert bool(jnp.allclose(out, ref, atol=1e-2, rtol=1e-2)), (out, ref)
    print("KERNEL_OK")
</pallas_src>

<mosaic_0001>
module attributes {stable_mosaic.version = 11 : i64} {
  func.func @kernel(%arg0: i32, %arg1: memref<28x16x128xbf16, #tpu.memory_space<vmem>>, %arg2: memref<1x512xf32, #tpu.memory_space<vmem>>, %arg3: memref<512x512xbf16, #tpu.memory_space<vmem>>, %arg4: memref<1x512xf32, #tpu.memory_space<vmem>>, %arg5: memref<256x128xbf16, #tpu.memory_space<vmem>>, %arg6: memref<1x128xf32, #tpu.memory_space<vmem>>, %arg7: memref<128x5xbf16, #tpu.memory_space<vmem>>, %arg8: memref<1x5xf32, #tpu.memory_space<vmem>>, %arg9: memref<16x5xf32, #tpu.memory_space<vmem>>, %arg10: memref<16x512xf32, #tpu.memory_space<vmem>>) attributes {dimension_semantics = [#tpu.dimension_semantics<parallel>], iteration_bounds = array<i64: 1>, scalar_prefetch = 0 : i64, scratch_operands = 1 : i64, tpu.core_type = #tpu.core_type<tc>, window_params = [{transform_indices = @transform_0, window_bounds = array<i64: 28, 16, 128>}, {pipeline_mode = #tpu.pipeline_mode<synchronous>, transform_indices = @transform_1, window_bounds = array<i64: 1, 512>}, {pipeline_mode = #tpu.pipeline_mode<synchronous>, transform_indices = @transform_2, window_bounds = array<i64: 512, 512>}, {pipeline_mode = #tpu.pipeline_mode<synchronous>, transform_indices = @transform_3, window_bounds = array<i64: 1, 512>}, {pipeline_mode = #tpu.pipeline_mode<synchronous>, transform_indices = @transform_4, window_bounds = array<i64: 256, 128>}, {pipeline_mode = #tpu.pipeline_mode<synchronous>, transform_indices = @transform_5, window_bounds = array<i64: 1, 128>}, {pipeline_mode = #tpu.pipeline_mode<synchronous>, transform_indices = @transform_6, window_bounds = array<i64: 128, 5>}, {pipeline_mode = #tpu.pipeline_mode<synchronous>, transform_indices = @transform_7, window_bounds = array<i64: 1, 5>}, {transform_indices = @transform_8, window_bounds = array<i64: 16, 5>}]} {
    %c0 = arith.constant 0 : index
    %c0_0 = arith.constant 0 : index
    %c0_1 = arith.constant 0 : index
    %0 = vector.load %arg1[%c0, %c0_0, %c0_1] : memref<28x16x128xbf16, #tpu.memory_space<vmem>>, vector<1x16x128xbf16>
    %1 = vector.shape_cast %0 : vector<1x16x128xbf16> to vector<16x128xbf16>
    %2 = arith.extf %1 : vector<16x128xbf16> to vector<16x128xf32>
    %c1 = arith.constant 1 : index
    %c0_2 = arith.constant 0 : index
    %c0_3 = arith.constant 0 : index
    %3 = vector.load %arg1[%c1, %c0_2, %c0_3] : memref<28x16x128xbf16, #tpu.memory_space<vmem>>, vector<1x16x128xbf16>
    %4 = vector.shape_cast %3 : vector<1x16x128xbf16> to vector<16x128xbf16>
    %5 = arith.extf %4 : vector<16x128xbf16> to vector<16x128xf32>
    %6 = arith.addf %2, %5 : vector<16x128xf32>
    %c2 = arith.constant 2 : index
    %c0_4 = arith.constant 0 : index
    %c0_5 = arith.constant 0 : index
    %7 = vector.load %arg1[%c2, %c0_4, %c0_5] : memref<28x16x128xbf16, #tpu.memory_space<vmem>>, vector<1x16x128xbf16>
    %8 = vector.shape_cast %7 : vector<1x16x128xbf16> to vector<16x128xbf16>
    %9 = arith.extf %8 : vector<16x128xbf16> to vector<16x128xf32>
    %c3 = arith.constant 3 : index
    %c0_6 = arith.constant 0 : index
    %c0_7 = arith.constant 0 : index
    %10 = vector.load %arg1[%c3, %c0_6, %c0_7] : memref<28x16x128xbf16, #tpu.memory_space<vmem>>, vector<1x16x128xbf16>
    %11 = vector.shape_cast %10 : vector<1x16x128xbf16> to vector<16x128xbf16>
    %12 = arith.extf %11 : vector<16x128xbf16> to vector<16x128xf32>
    %13 = arith.addf %9, %12 : vector<16x128xf32>
    %14 = arith.maximumf %6, %13 : vector<16x128xf32>
    %c0_8 = arith.constant 0 : index
    %c0_9 = arith.constant 0 : index
    %15 = vector.load %arg2[%c0_8, %c0_9] : memref<1x512xf32, #tpu.memory_space<vmem>>, vector<1x128xf32>
    %16 = vector.broadcast %15 : vector<1x128xf32> to vector<16x128xf32>
    %17 = arith.addf %14, %16 : vector<16x128xf32>
    %18 = math.tanh %17 : vector<16x128xf32>
    %c0_10 = arith.constant 0 : index
    %c0_11 = arith.constant 0 : index
    %19 = vector.load %arg10[%c0_10, %c0_11] : memref<16x512xf32, #tpu.memory_space<vmem>>, vector<16x128xf32>
    tpu.vector_store %arg10[%c0_10, %c0_11], %18 {strides = array<i32>} : memref<16x512xf32, #tpu.memory_space<vmem>>, vector<16x128xf32>,
    %c4 = arith.constant 4 : index
    %c0_12 = arith.constant 0 : index
    %c0_13 = arith.constant 0 : index
    %20 = vector.load %arg1[%c4, %c0_12, %c0_13] : memref<28x16x128xbf16, #tpu.memory_space<vmem>>, vector<1x16x128xbf16>
    %21 = vector.shape_cast %20 : vector<1x16x128xbf16> to vector<16x128xbf16>
    %22 = arith.extf %21 : vector<16x128xbf16> to vector<16x128xf32>
    %c5 = arith.constant 5 : index
    %c0_14 = arith.constant 0 : index
    %c0_15 = arith.constant 0 : index
    %23 = vector.load %arg1[%c5, %c0_14, %c0_15] : memref<28x16x128xbf16, #tpu.memory_space<vmem>>, vector<1x16x128xbf16>
    %24 = vector.shape_cast %23 : vector<1x16x128xbf16> to vector<16x128xbf16>
    %25 = arith.extf %24 : vector<16x128xbf16> to vector<16x128xf32>
    %26 = arith.addf %22, %25 : vector<16x128xf32>
    %c6 = arith.constant 6 : index
    %c0_16 = arith.constant 0 : index
    %c0_17 = arith.constant 0 : index
    %27 = vector.load %arg1[%c6, %c0_16, %c0_17] : memref<28x16x128xbf16, #tpu.memory_space<vmem>>, vector<1x16x128xbf16>
    %28 = vector.shape_cast %27 : vector<1x16x128xbf16> to vector<16x128xbf16>
    %29 = arith.extf %28 : vector<16x128xbf16> to vector<16x128xf32>
    %30 = arith.addf %26, %29 : vector<16x128xf32>
    %c7 = arith.constant 7 : index
    %c0_18 = arith.constant 0 : index
    %c0_19 = arith.constant 0 : index
    %31 = vector.load %arg1[%c7, %c0_18, %c0_19] : memref<28x16x128xbf16, #tpu.memory_space<vmem>>, vector<1x16x128xbf16>
    %32 = vector.shape_cast %31 : vector<1x16x128xbf16> to vector<16x128xbf16>
    %33 = arith.extf %32 : vector<16x128xbf16> to vector<16x128xf32>
    %c8 = arith.constant 8 : index
    %c0_20 = arith.constant 0 : index
    %c0_21 = arith.constant 0 : index
    %34 = vector.load %arg1[%c8, %c0_20, %c0_21] : memref<28x16x128xbf16, #tpu.memory_space<vmem>>, vector<1x16x128xbf16>
    %35 = vector.shape_cast %34 : vector<1x16x128xbf16> to vector<16x128xbf16>
    %36 = arith.extf %35 : vector<16x128xbf16> to vector<16x128xf32>
    %37 = arith.addf %33, %36 : vector<16x128xf32>
    %c9 = arith.constant 9 : index
    %c0_22 = arith.constant 0 : index
    %c0_23 = arith.constant 0 : index
    %38 = vector.load %arg1[%c9, %c0_22, %c0_23] : memref<28x16x128xbf16, #tpu.memory_space<vmem>>, vector<1x16x128xbf16>
    %39 = vector.shape_cast %38 : vector<1x16x128xbf16> to vector<16x128xbf16>
    %40 = arith.extf %39 : vector<16x128xbf16> to vector<16x128xf32>
    %41 = arith.addf %37, %40 : vector<16x128xf32>
    %42 = arith.maximumf %30, %41 : vector<16x128xf32>
    %c0_24 = arith.constant 0 : index
    %c128 = arith.constant 128 : index
    %43 = vector.load %arg2[%c0_24, %c128] : memref<1x512xf32, #tpu.memory_space<vmem>>, vector<1x128xf32>
    %44 = vector.broadcast %43 : vector<1x128xf32> to vector<16x128xf32>
    %45 = arith.addf %42, %44 : vector<16x128xf32>
    %46 = math.tanh %45 : vector<16x128xf32>
    %c0_25 = arith.constant 0 : index
    %c128_26 = arith.constant 128 : index
    %47 = vector.load %arg10[%c0_25, %c128_26] : memref<16x512xf32, #tpu.memory_space<vmem>>, vector<16x128xf32>
    tpu.vector_store %arg10[%c0_25, %c128_26], %46 {strides = array<i32>} : memref<16x512xf32, #tpu.memory_space<vmem>>, vector<16x128xf32>,
    %c10 = arith.constant 10 : index
    %c0_27 = arith.constant 0 : index
    %c0_28 = arith.constant 0 : index
    %48 = vector.load %arg1[%c10, %c0_27, %c0_28] : memref<28x16x128xbf16, #tpu.memory_space<vmem>>, vector<1x16x128xbf16>
    %49 = vector.shape_cast %48 : vector<1x16x128xbf16> to vector<16x128xbf16>
    %50 = arith.extf %49 : vector<16x128xbf16> to vector<16x128xf32>
    %c11 = arith.constant 11 : index
    %c0_29 = arith.constant 0 : index
    %c0_30 = arith.constant 0 : index
    %51 = vector.load %arg1[%c11, %c0_29, %c0_30] : memref<28x16x128xbf16, #tpu.memory_space<vmem>>, vector<1x16x128xbf16>
    %52 = vector.shape_cast %51 : vector<1x16x128xbf16> to vector<16x128xbf16>
    %53 = arith.extf %52 : vector<16x128xbf16> to vector<16x128xf32>
    %54 = arith.addf %50, %53 : vector<16x128xf32>
    %c12 = arith.constant 12 : index
    %c0_31 = arith.constant 0 : index
    %c0_32 = arith.constant 0 : index
    %55 = vector.load %arg1[%c12, %c0_31, %c0_32] : memref<28x16x128xbf16, #tpu.memory_space<vmem>>, vector<1x16x128xbf16>
    %56 = vector.shape_cast %55 : vector<1x16x128xbf16> to vector<16x128xbf16>
    %57 = arith.extf %56 : vector<16x128xbf16> to vector<16x128xf32>
    %58 = arith.addf %54, %57 : vector<16x128xf32>
    %c13 = arith.constant 13 : index
    %c0_33 = arith.constant 0 : index
    %c0_34 = arith.constant 0 : index
    %59 = vector.load %arg1[%c13, %c0_33, %c0_34] : memref<28x16x128xbf16, #tpu.memory_space<vmem>>, vector<1x16x128xbf16>
    %60 = vector.shape_cast %59 : vector<1x16x128xbf16> to vector<16x128xbf16>
    %61 = arith.extf %60 : vector<16x128xbf16> to vector<16x128xf32>
    %62 = arith.addf %58, %61 : vector<16x128xf32>
    %c14 = arith.constant 14 : index
    %c0_35 = arith.constant 0 : index
    %c0_36 = arith.constant 0 : index
    %63 = vector.load %arg1[%c14, %c0_35, %c0_36] : memref<28x16x128xbf16, #tpu.memory_space<vmem>>, vector<1x16x128xbf16>
    %64 = vector.shape_cast %63 : vector<1x16x128xbf16> to vector<16x128xbf16>
    %65 = arith.extf %64 : vector<16x128xbf16> to vector<16x128xf32>
    %c15 = arith.constant 15 : index
    %c0_37 = arith.constant 0 : index
    %c0_38 = arith.constant 0 : index
    %66 = vector.load %arg1[%c15, %c0_37, %c0_38] : memref<28x16x128xbf16, #tpu.memory_space<vmem>>, vector<1x16x128xbf16>
    %67 = vector.shape_cast %66 : vector<1x16x128xbf16> to vector<16x128xbf16>
    %68 = arith.extf %67 : vector<16x128xbf16> to vector<16x128xf32>
    %69 = arith.addf %65, %68 : vector<16x128xf32>
    %c16 = arith.constant 16 : index
    %c0_39 = arith.constant 0 : index
    %c0_40 = arith.constant 0 : index
    %70 = vector.load %arg1[%c16, %c0_39, %c0_40] : memref<28x16x128xbf16, #tpu.memory_space<vmem>>, vector<1x16x128xbf16>
    %71 = vector.shape_cast %70 : vector<1x16x128xbf16> to vector<16x128xbf16>
    %72 = arith.extf %71 : vector<16x128xbf16> to vector<16x128xf32>
    %73 = arith.addf %69, %72 : vector<16x128xf32>
    %c17 = arith.constant 17 : index
    %c0_41 = arith.constant 0 : index
    %c0_42 = arith.constant 0 : index
    %74 = vector.load %arg1[%c17, %c0_41, %c0_42] : memref<28x16x128xbf16, #tpu.memory_space<vmem>>, vector<1x16x128xbf16>
    %75 = vector.shape_cast %74 : vector<1x16x128xbf16> to vector<16x128xbf16>
    %76 = arith.extf %75 : vector<16x128xbf16> to vector<16x128xf32>
    %77 = arith.addf %73, %76 : vector<16x128xf32>
    %78 = arith.maximumf %62, %77 : vector<16x128xf32>
    %c0_43 = arith.constant 0 : index
    %c256 = arith.constant 256 : index
    %79 = vector.load %arg2[%c0_43, %c256] : memref<1x512xf32, #tpu.memory_space<vmem>>, vector<1x128xf32>
    %80 = vector.broadcast %79 : vector<1x128xf32> to vector<16x128xf32>
    %81 = arith.addf %78, %80 : vector<16x128xf32>
    %82 = math.tanh %81 : vector<16x128xf32>
    %c0_44 = arith.constant 0 : index
    %c256_45 = arith.constant 256 : index
    %83 = vector.load %arg10[%c0_44, %c256_45] : memref<16x512xf32, #tpu.memory_space<vmem>>, vector<16x128xf32>
    tpu.vector_store %arg10[%c0_44, %c256_45], %82 {strides = array<i32>} : memref<16x512xf32, #tpu.memory_space<vmem>>, vector<16x128xf32>,
    %c18 = arith.constant 18 : index
    %c0_46 = arith.constant 0 : index
    %c0_47 = arith.constant 0 : index
    %84 = vector.load %arg1[%c18, %c0_46, %c0_47] : memref<28x16x128xbf16, #tpu.memory_space<vmem>>, vector<1x16x128xbf16>
    %85 = vector.shape_cast %84 : vector<1x16x128xbf16> to vector<16x128xbf16>
    %86 = arith.extf %85 : vector<16x128xbf16> to vector<16x128xf32>
    %c19 = arith.constant 19 : index
    %c0_48 = arith.constant 0 : index
    %c0_49 = arith.constant 0 : index
    %87 = vector.load %arg1[%c19, %c0_48, %c0_49] : memref<28x16x128xbf16, #tpu.memory_space<vmem>>, vector<1x16x128xbf16>
    %88 = vector.shape_cast %87 : vector<1x16x128xbf16> to vector<16x128xbf16>
    %89 = arith.extf %88 : vector<16x128xbf16> to vector<16x128xf32>
    %90 = arith.addf %86, %89 : vector<16x128xf32>
    %c20 = arith.constant 20 : index
    %c0_50 = arith.constant 0 : index
    %c0_51 = arith.constant 0 : index
    %91 = vector.load %arg1[%c20, %c0_50, %c0_51] : memref<28x16x128xbf16, #tpu.memory_space<vmem>>, vector<1x16x128xbf16>
    %92 = vector.shape_cast %91 : vector<1x16x128xbf16> to vector<16x128xbf16>
    %93 = arith.extf %92 : vector<16x128xbf16> to vector<16x128xf32>
    %94 = arith.addf %90, %93 : vector<16x128xf32>
    %c21 = arith.constant 21 : index
    %c0_52 = arith.constant 0 : index
    %c0_53 = arith.constant 0 : index
    %95 = vector.load %arg1[%c21, %c0_52, %c0_53] : memref<28x16x128xbf16, #tpu.memory_space<vmem>>, vector<1x16x128xbf16>
    %96 = vector.shape_cast %95 : vector<1x16x128xbf16> to vector<16x128xbf16>
    %97 = arith.extf %96 : vector<16x128xbf16> to vector<16x128xf32>
    %98 = arith.addf %94, %97 : vector<16x128xf32>
    %c22 = arith.constant 22 : index
    %c0_54 = arith.constant 0 : index
    %c0_55 = arith.constant 0 : index
    %99 = vector.load %arg1[%c22, %c0_54, %c0_55] : memref<28x16x128xbf16, #tpu.memory_space<vmem>>, vector<1x16x128xbf16>
    %100 = vector.shape_cast %99 : vector<1x16x128xbf16> to vector<16x128xbf16>
    %101 = arith.extf %100 : vector<16x128xbf16> to vector<16x128xf32>
    %102 = arith.addf %98, %101 : vector<16x128xf32>
    %c23 = arith.constant 23 : index
    %c0_56 = arith.constant 0 : index
    %c0_57 = arith.constant 0 : index
    %103 = vector.load %arg1[%c23, %c0_56, %c0_57] : memref<28x16x128xbf16, #tpu.memory_space<vmem>>, vector<1x16x128xbf16>
    %104 = vector.shape_cast %103 : vector<1x16x128xbf16> to vector<16x128xbf16>
    %105 = arith.extf %104 : vector<16x128xbf16> to vector<16x128xf32>
    %c24 = arith.constant 24 : index
    %c0_58 = arith.constant 0 : index
    %c0_59 = arith.constant 0 : index
    %106 = vector.load %arg1[%c24, %c0_58, %c0_59] : memref<28x16x128xbf16, #tpu.memory_space<vmem>>, vector<1x16x128xbf16>
    %107 = vector.shape_cast %106 : vector<1x16x128xbf16> to vector<16x128xbf16>
    %108 = arith.extf %107 : vector<16x128xbf16> to vector<16x128xf32>
    %109 = arith.addf %105, %108 : vector<16x128xf32>
    %c25 = arith.constant 25 : index
    %c0_60 = arith.constant 0 : index
    %c0_61 = arith.constant 0 : index
    %110 = vector.load %arg1[%c25, %c0_60, %c0_61] : memref<28x16x128xbf16, #tpu.memory_space<vmem>>, vector<1x16x128xbf16>
    %111 = vector.shape_cast %110 : vector<1x16x128xbf16> to vector<16x128xbf16>
    %112 = arith.extf %111 : vector<16x128xbf16> to vector<16x128xf32>
    %113 = arith.addf %109, %112 : vector<16x128xf32>
    %c26 = arith.constant 26 : index
    %c0_62 = arith.constant 0 : index
    %c0_63 = arith.constant 0 : index
    %114 = vector.load %arg1[%c26, %c0_62, %c0_63] : memref<28x16x128xbf16, #tpu.memory_space<vmem>>, vector<1x16x128xbf16>
    %115 = vector.shape_cast %114 : vector<1x16x128xbf16> to vector<16x128xbf16>
    %116 = arith.extf %115 : vector<16x128xbf16> to vector<16x128xf32>
    %117 = arith.addf %113, %116 : vector<16x128xf32>
    %c27 = arith.constant 27 : index
    %c0_64 = arith.constant 0 : index
    %c0_65 = arith.constant 0 : index
    %118 = vector.load %arg1[%c27, %c0_64, %c0_65] : memref<28x16x128xbf16, #tpu.memory_space<vmem>>, vector<1x16x128xbf16>
    %119 = vector.shape_cast %118 : vector<1x16x128xbf16> to vector<16x128xbf16>
    %120 = arith.extf %119 : vector<16x128xbf16> to vector<16x128xf32>
    %121 = arith.addf %117, %120 : vector<16x128xf32>
    %122 = arith.maximumf %102, %121 : vector<16x128xf32>
    %c0_66 = arith.constant 0 : index
    %c384 = arith.constant 384 : index
    %123 = vector.load %arg2[%c0_66, %c384] : memref<1x512xf32, #tpu.memory_space<vmem>>, vector<1x128xf32>
    %124 = vector.broadcast %123 : vector<1x128xf32> to vector<16x128xf32>
    %125 = arith.addf %122, %124 : vector<16x128xf32>
    %126 = math.tanh %125 : vector<16x128xf32>
    %c0_67 = arith.constant 0 : index
    %c384_68 = arith.constant 384 : index
    %127 = vector.load %arg10[%c0_67, %c384_68] : memref<16x512xf32, #tpu.memory_space<vmem>>, vector<16x128xf32>
    tpu.vector_store %arg10[%c0_67, %c384_68], %126 {strides = array<i32>} : memref<16x512xf32, #tpu.memory_space<vmem>>, vector<16x128xf32>,
    %c0_69 = arith.constant 0 : index
    %c0_70 = arith.constant 0 : index
    %128 = vector.load %arg10[%c0_69, %c0_70] : memref<16x512xf32, #tpu.memory_space<vmem>>, vector<16x512xf32>
    %129 = arith.truncf %128 : vector<16x512xf32> to vector<16x512xbf16>
    %c0_71 = arith.constant 0 : index
    %c0_72 = arith.constant 0 : index
    %130 = vector.load %arg3[%c0_71, %c0_72] : memref<512x512xbf16, #tpu.memory_space<vmem>>, vector<512x512xbf16>
    %cst = arith.constant dense<0.000000e+00> : vector<16x512xf32>
    %131 = tpu.matmul %129, %130, %cst {dimension_numbers = #tpu.dot_dimension_numbers<[1], [0], [0], [1], [0, 0, 1, 1], [], []>} : vector<16x512xbf16>, vector<512x512xbf16>, vector<16x512xf32> -> vector<16x512xf32>
    %c0_73 = arith.constant 0 : index
    %c0_74 = arith.constant 0 : index
    %132 = vector.load %arg4[%c0_73, %c0_74] : memref<1x512xf32, #tpu.memory_space<vmem>>, vector<1x512xf32>
    %133 = vector.broadcast %132 : vector<1x512xf32> to vector<16x512xf32>
    %134 = arith.addf %131, %133 : vector<16x512xf32>
    %135 = vector.extract_strided_slice %134 {offsets = [0, 0], sizes = [16, 256], strides = [1, 1]} : vector<16x512xf32> to vector<16x256xf32>
    %136 = vector.extract_strided_slice %134 {offsets = [0, 256], sizes = [16, 256], strides = [1, 1]} : vector<16x512xf32> to vector<16x256xf32>
    %137 = arith.maximumf %135, %136 : vector<16x256xf32>
    %138 = math.tanh %137 : vector<16x256xf32>
    %139 = arith.truncf %138 : vector<16x256xf32> to vector<16x256xbf16>
    %c0_75 = arith.constant 0 : index
    %c0_76 = arith.constant 0 : index
    %140 = vector.load %arg5[%c0_75, %c0_76] : memref<256x128xbf16, #tpu.memory_space<vmem>>, vector<256x128xbf16>
    %cst_77 = arith.constant dense<0.000000e+00> : vector<16x128xf32>
    %141 = tpu.matmul %139, %140, %cst_77 {dimension_numbers = #tpu.dot_dimension_numbers<[1], [0], [0], [1], [0, 0, 1, 1], [], []>} : vector<16x256xbf16>, vector<256x128xbf16>, vector<16x128xf32> -> vector<16x128xf32>
    %c0_78 = arith.constant 0 : index
    %c0_79 = arith.constant 0 : index
    %142 = vector.load %arg6[%c0_78, %c0_79] : memref<1x128xf32, #tpu.memory_space<vmem>>, vector<1x128xf32>
    %143 = vector.broadcast %142 : vector<1x128xf32> to vector<16x128xf32>
    %144 = arith.addf %141, %143 : vector<16x128xf32>
    %cst_80 = arith.constant 0.000000e+00 : f32
    %145 = vector.broadcast %cst_80 : f32 to vector<16x128xf32>
    %146 = arith.maximumf %144, %145 : vector<16x128xf32>
    %147 = arith.truncf %146 : vector<16x128xf32> to vector<16x128xbf16>
    %c0_81 = arith.constant 0 : index
    %c0_82 = arith.constant 0 : index
    %148 = vector.load %arg7[%c0_81, %c0_82] : memref<128x5xbf16, #tpu.memory_space<vmem>>, vector<128x5xbf16>
    %cst_83 = arith.constant dense<0.000000e+00> : vector<16x5xf32>
    %149 = tpu.matmul %147, %148, %cst_83 {dimension_numbers = #tpu.dot_dimension_numbers<[1], [0], [0], [1], [0, 0, 1, 1], [], []>} : vector<16x128xbf16>, vector<128x5xbf16>, vector<16x5xf32> -> vector<16x5xf32>
    %c0_84 = arith.constant 0 : index
    %c0_85 = arith.constant 0 : index
    %150 = vector.load %arg8[%c0_84, %c0_85] : memref<1x5xf32, #tpu.memory_space<vmem>>, vector<1x5xf32>
    %151 = vector.broadcast %150 : vector<1x5xf32> to vector<16x5xf32>
    %152 = arith.addf %149, %151 : vector<16x5xf32>
    %cst_86 = arith.constant dense<0xFF800000> : vector<16xf32>
    %153 = vector.multi_reduction <maximumf>, %152, %cst_86 [1] : vector<16x5xf32> to vector<16xf32>
    %154 = vector.shape_cast %153 : vector<16xf32> to vector<16x1xf32>
    %155 = vector.broadcast %154 : vector<16x1xf32> to vector<16x5xf32>
    %156 = arith.subf %152, %155 : vector<16x5xf32>
    %157 = math.exp %156 : vector<16x5xf32>
    %cst_87 = arith.constant dense<0.000000e+00> : vector<16xf32>
    %158 = vector.multi_reduction <add>, %157, %cst_87 [1] : vector<16x5xf32> to vector<16xf32>
    %159 = vector.shape_cast %158 : vector<16xf32> to vector<16x1xf32>
    %160 = math.log %159 : vector<16x1xf32>
    %161 = vector.broadcast %160 : vector<16x1xf32> to vector<16x5xf32>
    %162 = arith.subf %156, %161 : vector<16x5xf32>
    %c0_88 = arith.constant 0 : index
    %c0_89 = arith.constant 0 : index
    %163 = vector.load %arg9[%c0_88, %c0_89] : memref<16x5xf32, #tpu.memory_space<vmem>>, vector<16x5xf32>
    tpu.vector_store %arg9[%c0_88, %c0_89], %162 {strides = array<i32>} : memref<16x5xf32, #tpu.memory_space<vmem>>, vector<16x5xf32>,
    return
  }
  func.func @transform_0(%arg0: i32) -> (i32, i32, i32) {
    %c0_i32 = arith.constant 0 : i32
    %c0_i32_0 = arith.constant 0 : i32
    %c0_i32_1 = arith.constant 0 : i32
    return %c0_i32, %arg0, %c0_i32_0 : i32, i32, i32
  }
  func.func @transform_1(%arg0: i32) -> (i32, i32) {
    %c0_i32 = arith.constant 0 : i32
    %c0_i32_0 = arith.constant 0 : i32
    %c0_i32_1 = arith.constant 0 : i32
    return %c0_i32, %c0_i32_0 : i32, i32
  }
  func.func @transform_2(%arg0: i32) -> (i32, i32) {
    %c0_i32 = arith.constant 0 : i32
    %c0_i32_0 = arith.constant 0 : i32
    %c0_i32_1 = arith.constant 0 : i32
    return %c0_i32, %c0_i32_0 : i32, i32
  }
  func.func @transform_3(%arg0: i32) -> (i32, i32) {
    %c0_i32 = arith.constant 0 : i32
    %c0_i32_0 = arith.constant 0 : i32
    %c0_i32_1 = arith.constant 0 : i32
    return %c0_i32, %c0_i32_0 : i32, i32
  }
  func.func @transform_4(%arg0: i32) -> (i32, i32) {
    %c0_i32 = arith.constant 0 : i32
    %c0_i32_0 = arith.constant 0 : i32
    %c0_i32_1 = arith.constant 0 : i32
    return %c0_i32, %c0_i32_0 : i32, i32
  }
  func.func @transform_5(%arg0: i32) -> (i32, i32) {
    %c0_i32 = arith.constant 0 : i32
    %c0_i32_0 = arith.constant 0 : i32
    %c0_i32_1 = arith.constant 0 : i32
    return %c0_i32, %c0_i32_0 : i32, i32
  }
  func.func @transform_6(%arg0: i32) -> (i32, i32) {
    %c0_i32 = arith.constant 0 : i32
    %c0_i32_0 = arith.constant 0 : i32
    %c0_i32_1 = arith.constant 0 : i32
    return %c0_i32, %c0_i32_0 : i32, i32
  }
  func.func @transform_7(%arg0: i32) -> (i32, i32) {
    %c0_i32 = arith.constant 0 : i32
    %c0_i32_0 = arith.constant 0 : i32
    %c0_i32_1 = arith.constant 0 : i32
    return %c0_i32, %c0_i32_0 : i32, i32
  }
  func.func @transform_8(%arg0: i32) -> (i32, i32) {
    %c0_i32 = arith.constant 0 : i32
    %c0_i32_0 = arith.constant 0 : i32
    return %arg0, %c0_i32 : i32, i32
  }
}

</mosaic_0001>

<llo_original>
// kernel: _lambda_.1
$region0: #{_lambda_.1}
  #allocation0 [shape = 'u32[]', space=smem, size = 0x4, offset = 0x4, fixed_abs, tag = 'smem constant byte address 0x4 - core index']
  #allocation1 [shape = 'u32[144,128]{1,0:T(1,128)}', space=vmem, size = 0x12000, scoped, tag = 'internal scratch']
  #allocation2 [shape = 'f32[16,512]{1,0:T(8,128)}', space=vmem, size = 0x8000, scoped, tag = 'scratch operand']
  %s0 = inlined_call_operand.vmem [shape: bf16[28,16,128], index: 0, kind: input, shape index: {}]
  %s1 = inlined_call_operand.vmem [shape: f32[1,512], index: 1, kind: input, shape index: {}]
  %s2 = inlined_call_operand.vmem [shape: bf16[512,512], index: 2, kind: input, shape index: {}]
  %s3 = inlined_call_operand.vmem [shape: f32[1,512], index: 3, kind: input, shape index: {}]
  %s4 = inlined_call_operand.vmem [shape: bf16[256,128], index: 4, kind: input, shape index: {}]
  %s5 = inlined_call_operand.vmem [shape: f32[1,128], index: 5, kind: input, shape index: {}]
  %s6 = inlined_call_operand.vmem [shape: bf16[128,5], index: 6, kind: input, shape index: {}]
  %s7 = inlined_call_operand.vmem [shape: f32[1,5], index: 7, kind: input, shape index: {}]
  %s8 = inlined_call_operand.vmem [shape: f32[16,5], index: 8, kind: output, shape index: {}]
  %s9 = sld [smem:[#allocation0]]
  $region42: #{_lambda_.1} parent=0
    _
  %s11 = ssub.s32 1, %s9
  %s12 = scalar_select 0, %s11, %s9
  // Predicated region
  $region2: #{_lambda_.1} parent=0 // pred_check
    _
  $region3: #{_lambda_.1} parent=0 // pred_check_branch
    %14 = sbr.rel (0) target = $region5
  $region4: #{_lambda_.1} parent=0 // pred_region
    _
  $region5: #{_lambda_.1} parent=0 // pred_fallthru
    _
  // Predicated region
  $region6: #{_lambda_.1} parent=0 // pred_check
    _
  $region7: #{_lambda_.1} parent=0 // pred_check_branch
    %16 = sbr.rel (0) target = $region9
  $region8: #{_lambda_.1} parent=0 // pred_region
    _
  $region9: #{_lambda_.1} parent=0 // pred_fallthru
    _
  // Predicated region
  $region10: #{_lambda_.1} parent=0 // pred_check
    _
  $region11: #{_lambda_.1} parent=0 // pred_check_branch
    %18 = sbr.rel (0) target = $region13
  $region12: #{_lambda_.1} parent=0 // pred_region
    _
  $region13: #{_lambda_.1} parent=0 // pred_fallthru
    _
  // Predicated region
  $region14: #{_lambda_.1} parent=0 // pred_check
    _
  $region15: #{_lambda_.1} parent=0 // pred_check_branch
    %20 = sbr.rel (0) target = $region17
  $region16: #{_lambda_.1} parent=0 // pred_region
    _
  $region17: #{_lambda_.1} parent=0 // pred_fallthru
    _
  // Predicated region
  $region18: #{_lambda_.1} parent=0 // pred_check
    _
  $region19: #{_lambda_.1} parent=0 // pred_check_branch
    %22 = sbr.rel (0) target = $region21
  $region20: #{_lambda_.1} parent=0 // pred_region
    _
  $region21: #{_lambda_.1} parent=0 // pred_fallthru
    _
  // Predicated region
  $region22: #{_lambda_.1} parent=0 // pred_check
    _
  $region23: #{_lambda_.1} parent=0 // pred_check_branch
    %24 = sbr.rel (0) target = $region25
  $region24: #{_lambda_.1} parent=0 // pred_region
    _
  $region25: #{_lambda_.1} parent=0 // pred_fallthru
    _
  // Predicated region
  $region26: #{_lambda_.1} parent=0 // pred_check
    _
  $region27: #{_lambda_.1} parent=0 // pred_check_branch
    %26 = sbr.rel (0) target = $region29
  $region28: #{_lambda_.1} parent=0 // pred_region
    _
  $region29: #{_lambda_.1} parent=0 // pred_fallthru
    _
  // Predicated region
  $region30: #{_lambda_.1} parent=0 // pred_check
    _
  $region31: #{_lambda_.1} parent=0 // pred_check_branch
    %28 = sbr.rel (0) target = $region33
  $region32: #{_lambda_.1} parent=0 // pred_region
    _
  $region33: #{_lambda_.1} parent=0 // pred_fallthru
    _
  %v30 = vld [vmem:[%s0] sm:$0xf]
  %v31 = vld [vmem:[%s0 + $0x4] sm:$0xf]
  %v32 = vunpack.c.l.bf16 %v30
  %v33 = vunpack.c.l.bf16 %v31
  %s34 = scalar_lea.vmem %s0, 8
  %v35 = vld [vmem:[%s34] sm:$0xf]
  %v36 = vld [vmem:[%s34 + $0x4] sm:$0xf]
  %v37 = vunpack.c.l.bf16 %v35
  %v38 = vunpack.c.l.bf16 %v36
  %v39 = vadd.f32 %v32, %v37
  %v40 = vadd.f32 %v33, %v38
  %s41 = scalar_lea.vmem %s0, 16
  %v42 = vld [vmem:[%s41] sm:$0xf]
  %v43 = vld [vmem:[%s41 + $0x4] sm:$0xf]
  %v44 = vunpack.c.l.bf16 %v42
  %v45 = vunpack.c.l.bf16 %v43
  %s46 = scalar_lea.vmem %s0, 24
  %v47 = vld [vmem:[%s46] sm:$0xf]
  %v48 = vld [vmem:[%s46 + $0x4] sm:$0xf]
  %v49 = vunpack.c.l.bf16 %v47
  %v50 = vunpack.c.l.bf16 %v48
  %v51 = vadd.f32 %v44, %v49
  %v52 = vadd.f32 %v45, %v50
  %v53 = vmax.f32 %v39, %v51
  %v54 = vmax.f32 %v40, %v52
  %v55 = vld [vmem:[%s1] sm:$0x1]
  %v57 = vlaneseq
  %v58 = vshrl.u32 %v57, 7
  %v59 = vsub.s32 0, %v58
  %v60 = vrot.slane %v55, %v59
  %v62 = vadd.f32 %v53, %v60
  %v63 = vadd.f32 %v54, %v60
  %v64 = vtanh.pop %v62
  %v65 = vtanh.pop %v63
  %66 = vst [vmem:[#allocation2] sm:$0xff] %v64
  %67 = vst [vmem:[#allocation2 + $0x20] sm:$0xff] %v65
  %s68 = scalar_lea.vmem %s0, 32
  %v69 = vld [vmem:[%s68] sm:$0xf]
  %v70 = vld [vmem:[%s68 + $0x4] sm:$0xf]
  %v71 = vunpack.c.l.bf16 %v69
  %v72 = vunpack.c.l.bf16 %v70
  %s73 = scalar_lea.vmem %s0, 40
  %v74 = vld [vmem:[%s73] sm:$0xf]
  %v75 = vld [vmem:[%s73 + $0x4] sm:$0xf]
  %v76 = vunpack.c.l.bf16 %v74
  %v77 = vunpack.c.l.bf16 %v75
  %v78 = vadd.f32 %v71, %v76
  %v79 = vadd.f32 %v72, %v77
  %s80 = scalar_lea.vmem %s0, 48
  %v81 = vld [vmem:[%s80] sm:$0xf]
  %v82 = vld [vmem:[%s80 + $0x4] sm:$0xf]
  %v83 = vunpack.c.l.bf16 %v81
  %v84 = vunpack.c.l.bf16 %v82
  %v85 = vadd.f32 %v78, %v83
  %v86 = vadd.f32 %v79, %v84
  %s87 = scalar_lea.vmem %s0, 56
  %v88 = vld [vmem:[%s87] sm:$0xf]
  %v89 = vld [vmem:[%s87 + $0x4] sm:$0xf]
  %v90 = vunpack.c.l.bf16 %v88
  %v91 = vunpack.c.l.bf16 %v89
  %s92 = scalar_lea.vmem %s0, 64
  %v93 = vld [vmem:[%s92] sm:$0xf]
  %v94 = vld [vmem:[%s92 + $0x4] sm:$0xf]
  %v95 = vunpack.c.l.bf16 %v93
  %v96 = vunpack.c.l.bf16 %v94
  %v97 = vadd.f32 %v90, %v95
  %v98 = vadd.f32 %v91, %v96
  %s99 = scalar_lea.vmem %s0, 72
  %v100 = vld [vmem:[%s99] sm:$0xf]
  %v101 = vld [vmem:[%s99 + $0x4] sm:$0xf]
  %v102 = vunpack.c.l.bf16 %v100
  %v103 = vunpack.c.l.bf16 %v101
  %v104 = vadd.f32 %v97, %v102
  %v105 = vadd.f32 %v98, %v103
  %v106 = vmax.f32 %v85, %v104
  %v107 = vmax.f32 %v86, %v105
  %v108 = vld [vmem:[%s1 + $0x1] sm:$0x1]
  %v110 = vlaneseq
  %v111 = vshrl.u32 %v110, 7
  %v112 = vsub.s32 0, %v111
  %v113 = vrot.slane %v108, %v112
  %v115 = vadd.f32 %v106, %v113
  %v116 = vadd.f32 %v107, %v113
  %v117 = vtanh.pop %v115
  %v118 = vtanh.pop %v116
  %119 = vst [vmem:[#allocation2 + $0x8] sm:$0xff] %v117
  %120 = vst [vmem:[#allocation2 + $0x28] sm:$0xff] %v118
  %s121 = scalar_lea.vmem %s0, 80
  %v122 = vld [vmem:[%s121] sm:$0xf]
  %v123 = vld [vmem:[%s121 + $0x4] sm:$0xf]
  %v124 = vunpack.c.l.bf16 %v122
  %v125 = vunpack.c.l.bf16 %v123
  %s126 = scalar_lea.vmem %s0, 88
  %v127 = vld [vmem:[%s126] sm:$0xf]
  %v128 = vld [vmem:[%s126 + $0x4] sm:$0xf]
  %v129 = vunpack.c.l.bf16 %v127
  %v130 = vunpack.c.l.bf16 %v128
  %v131 = vadd.f32 %v124, %v129
  %v132 = vadd.f32 %v125, %v130
  %s133 = scalar_lea.vmem %s0, 96
  %v134 = vld [vmem:[%s133] sm:$0xf]
  %v135 = vld [vmem:[%s133 + $0x4] sm:$0xf]
  %v136 = vunpack.c.l.bf16 %v134
  %v137 = vunpack.c.l.bf16 %v135
  %v138 = vadd.f32 %v131, %v136
  %v139 = vadd.f32 %v132, %v137
  %s140 = scalar_lea.vmem %s0, 104
  %v141 = vld [vmem:[%s140] sm:$0xf]
  %v142 = vld [vmem:[%s140 + $0x4] sm:$0xf]
  %v143 = vunpack.c.l.bf16 %v141
  %v144 = vunpack.c.l.bf16 %v142
  %v145 = vadd.f32 %v138, %v143
  %v146 = vadd.f32 %v139, %v144
  %s147 = scalar_lea.vmem %s0, 112
  %v148 = vld [vmem:[%s147] sm:$0xf]
  %v149 = vld [vmem:[%s147 + $0x4] sm:$0xf]
  %v150 = vunpack.c.l.bf16 %v148
  %v151 = vunpack.c.l.bf16 %v149
  %s152 = scalar_lea.vmem %s0, 120
  %v153 = vld [vmem:[%s152] sm:$0xf]
  %v154 = vld [vmem:[%s152 + $0x4] sm:$0xf]
  %v155 = vunpack.c.l.bf16 %v153
  %v156 = vunpack.c.l.bf16 %v154
  %v157 = vadd.f32 %v150, %v155
  %v158 = vadd.f32 %v151, %v156
  %s159 = scalar_lea.vmem %s0, 128
  %v160 = vld [vmem:[%s159] sm:$0xf]
  %v161 = vld [vmem:[%s159 + $0x4] sm:$0xf]
  %v162 = vunpack.c.l.bf16 %v160
  %v163 = vunpack.c.l.bf16 %v161
  %v164 = vadd.f32 %v157, %v162
  %v165 = vadd.f32 %v158, %v163
  %s166 = scalar_lea.vmem %s0, 136
  %v167 = vld [vmem:[%s166] sm:$0xf]
  %v168 = vld [vmem:[%s166 + $0x4] sm:$0xf]
  %v169 = vunpack.c.l.bf16 %v167
  %v170 = vunpack.c.l.bf16 %v168
  %v171 = vadd.f32 %v164, %v169
  %v172 = vadd.f32 %v165, %v170
  %v173 = vmax.f32 %v145, %v171
  %v174 = vmax.f32 %v146, %v172
  %v175 = vld [vmem:[%s1 + $0x2] sm:$0x1]
  %v177 = vlaneseq
  %v178 = vshrl.u32 %v177, 7
  %v179 = vsub.s32 0, %v178
  %v180 = vrot.slane %v175, %v179
  %v182 = vadd.f32 %v173, %v180
  %v183 = vadd.f32 %v174, %v180
  %v184 = vtanh.pop %v182
  %v185 = vtanh.pop %v183
  %186 = vst [vmem:[#allocation2 + $0x10] sm:$0xff] %v184
  %187 = vst [vmem:[#allocation2 + $0x30] sm:$0xff] %v185
  %s188 = scalar_lea.vmem %s0, 144
  %v189 = vld [vmem:[%s188] sm:$0xf]
  %v190 = vld [vmem:[%s188 + $0x4] sm:$0xf]
  %v191 = vunpack.c.l.bf16 %v189
  %v192 = vunpack.c.l.bf16 %v190
  %s193 = scalar_lea.vmem %s0, 152
  %v194 = vld [vmem:[%s193] sm:$0xf]
  %v195 = vld [vmem:[%s193 + $0x4] sm:$0xf]
  %v196 = vunpack.c.l.bf16 %v194
  %v197 = vunpack.c.l.bf16 %v195
  %v198 = vadd.f32 %v191, %v196
  %v199 = vadd.f32 %v192, %v197
  %s200 = scalar_lea.vmem %s0, 160
  %v201 = vld [vmem:[%s200] sm:$0xf]
  %v202 = vld [vmem:[%s200 + $0x4] sm:$0xf]
  %v203 = vunpack.c.l.bf16 %v201
  %v204 = vunpack.c.l.bf16 %v202
  %v205 = vadd.f32 %v198, %v203
  %v206 = vadd.f32 %v199, %v204
  %s207 = scalar_lea.vmem %s0, 168
  %v208 = vld [vmem:[%s207] sm:$0xf]
  %v209 = vld [vmem:[%s207 + $0x4] sm:$0xf]
  %v210 = vunpack.c.l.bf16 %v208
  %v211 = vunpack.c.l.bf16 %v209
  %v212 = vadd.f32 %v205, %v210
  %v213 = vadd.f32 %v206, %v211
  %s214 = scalar_lea.vmem %s0, 176
  %v215 = vld [vmem:[%s214] sm:$0xf]
  %v216 = vld [vmem:[%s214 + $0x4] sm:$0xf]
  %v217 = vunpack.c.l.bf16 %v215
  %v218 = vunpack.c.l.bf16 %v216
  %v219 = vadd.f32 %v212, %v217
  %v220 = vadd.f32 %v213, %v218
  %s221 = scalar_lea.vmem %s0, 184
  %v222 = vld [vmem:[%s221] sm:$0xf]
  %v223 = vld [vmem:[%s221 + $0x4] sm:$0xf]
  %v224 = vunpack.c.l.bf16 %v222
  %v225 = vunpack.c.l.bf16 %v223
  %s226 = scalar_lea.vmem %s0, 192
  %v227 = vld [vmem:[%s226] sm:$0xf]
  %v228 = vld [vmem:[%s226 + $0x4] sm:$0xf]
  %v229 = vunpack.c.l.bf16 %v227
  %v230 = vunpack.c.l.bf16 %v228
  %v231 = vadd.f32 %v224, %v229
  %v232 = vadd.f32 %v225, %v230
  %s233 = scalar_lea.vmem %s0, 200
  %v234 = vld [vmem:[%s233] sm:$0xf]
  %v235 = vld [vmem:[%s233 + $0x4] sm:$0xf]
  %v236 = vunpack.c.l.bf16 %v234
  %v237 = vunpack.c.l.bf16 %v235
  %v238 = vadd.f32 %v231, %v236
  %v239 = vadd.f32 %v232, %v237
  %s240 = scalar_lea.vmem %s0, 208
  %v241 = vld [vmem:[%s240] sm:$0xf]
  %v242 = vld [vmem:[%s240 + $0x4] sm:$0xf]
  %v243 = vunpack.c.l.bf16 %v241
  %v244 = vunpack.c.l.bf16 %v242
  %v245 = vadd.f32 %v238, %v243
  %v246 = vadd.f32 %v239, %v244
  %s247 = scalar_lea.vmem %s0, 216
  %v248 = vld [vmem:[%s247] sm:$0xf]
  %v249 = vld [vmem:[%s247 + $0x4] sm:$0xf]
  %v250 = vunpack.c.l.bf16 %v248
  %v251 = vunpack.c.l.bf16 %v249
  %v252 = vadd.f32 %v245, %v250
  %v253 = vadd.f32 %v246, %v251
  %v254 = vmax.f32 %v219, %v252
  %v255 = vmax.f32 %v220, %v253
  %v256 = vld [vmem:[%s1 + $0x3] sm:$0x1]
  %v258 = vlaneseq
  %v259 = vshrl.u32 %v258, 7
  %v260 = vsub.s32 0, %v259
  %v261 = vrot.slane %v256, %v260
  %v263 = vadd.f32 %v254, %v261
  %v264 = vadd.f32 %v255, %v261
  %v265 = vtanh.pop %v263
  %v266 = vtanh.pop %v264
  %267 = vst [vmem:[#allocation2 + $0x18] sm:$0xff] %v265
  %268 = vst [vmem:[#allocation2 + $0x38] sm:$0xff] %v266
  %v269 = vld [vmem:[#allocation2] sm:$0xff]
  %v270 = vld [vmem:[#allocation2 + $0x8] sm:$0xff]
  %v271 = vld [vmem:[#allocation2 + $0x10] sm:$0xff]
  %v272 = vld [vmem:[#allocation2 + $0x18] sm:$0xff]
  %v273 = vld [vmem:[#allocation2 + $0x20] sm:$0xff]
  %v274 = vld [vmem:[#allocation2 + $0x28] sm:$0xff]
  %v275 = vld [vmem:[#allocation2 + $0x30] sm:$0xff]
  %v276 = vld [vmem:[#allocation2 + $0x38] sm:$0xff]
  %v277 = vpack.c.bf16 %v273, %v269
  %v278 = vpack.c.bf16 %v274, %v270
  %v279 = vpack.c.bf16 %v275, %v271
  %v280 = vpack.c.bf16 %v276, %v272
  %v281 = vld [vmem:[%s2] sm:$0xff]
  %v282 = vld [vmem:[%s2 + $0x8] sm:$0xff]
  %v283 = vld [vmem:[%s2 + $0x10] sm:$0xff]
  %v284 = vld [vmem:[%s2 + $0x18] sm:$0xff]
  %v285 = vld [vmem:[%s2 + $0x20] sm:$0xff]
  %v286 = vld [vmem:[%s2 + $0x28] sm:$0xff]
  %v287 = vld [vmem:[%s2 + $0x30] sm:$0xff]
  %v288 = vld [vmem:[%s2 + $0x38] sm:$0xff]
  %v289 = vld [vmem:[%s2 + $0x40] sm:$0xff]
  %v290 = vld [vmem:[%s2 + $0x48] sm:$0xff]
  %v291 = vld [vmem:[%s2 + $0x50] sm:$0xff]
  %v292 = vld [vmem:[%s2 + $0x58] sm:$0xff]
  %v293 = vld [vmem:[%s2 + $0x60] sm:$0xff]
  %v294 = vld [vmem:[%s2 + $0x68] sm:$0xff]
  %v295 = vld [vmem:[%s2 + $0x70] sm:$0xff]
  %v296 = vld [vmem:[%s2 + $0x78] sm:$0xff]
  %v297 = vld [vmem:[%s2 + $0x80] sm:$0xff]
  %v298 = vld [vmem:[%s2 + $0x88] sm:$0xff]
  %v299 = vld [vmem:[%s2 + $0x90] sm:$0xff]
  %v300 = vld [vmem:[%s2 + $0x98] sm:$0xff]
  %v301 = vld [vmem:[%s2 + $0xa0] sm:$0xff]
  %v302 = vld [vmem:[%s2 + $0xa8] sm:$0xff]
  %v303 = vld [vmem:[%s2 + $0xb0] sm:$0xff]
  %v304 = vld [vmem:[%s2 + $0xb8] sm:$0xff]
  %v305 = vld [vmem:[%s2 + $0xc0] sm:$0xff]
  %v306 = vld [vmem:[%s2 + $0xc8] sm:$0xff]
  %v307 = vld [vmem:[%s2 + $0xd0] sm:$0xff]
  %v308 = vld [vmem:[%s2 + $0xd8] sm:$0xff]
  %v309 = vld [vmem:[%s2 + $0xe0] sm:$0xff]
  %v310 = vld [vmem:[%s2 + $0xe8] sm:$0xff]
  %v311 = vld [vmem:[%s2 + $0xf0] sm:$0xff]
  %v312 = vld [vmem:[%s2 + $0xf8] sm:$0xff]
  %v313 = vld [vmem:[%s2 + $0x100] sm:$0xff]
  %v314 = vld [vmem:[%s2 + $0x108] sm:$0xff]
  %v315 = vld [vmem:[%s2 + $0x110] sm:$0xff]
  %v316 = vld [vmem:[%s2 + $0x118] sm:$0xff]
  %v317 = vld [vmem:[%s2 + $0x120] sm:$0xff]
  %v318 = vld [vmem:[%s2 + $0x128] sm:$0xff]
  %v319 = vld [vmem:[%s2 + $0x130] sm:$0xff]
  %v320 = vld [vmem:[%s2 + $0x138] sm:$0xff]
  %v321 = vld [vmem:[%s2 + $0x140] sm:$0xff]
  %v322 = vld [vmem:[%s2 + $0x148] sm:$0xff]
  %v323 = vld [vmem:[%s2 + $0x150] sm:$0xff]
  %v324 = vld [vmem:[%s2 + $0x158] sm:$0xff]
  %v325 = vld [vmem:[%s2 + $0x160] sm:$0xff]
  %v326 = vld [vmem:[%s2 + $0x168] sm:$0xff]
  %v327 = vld [vmem:[%s2 + $0x170] sm:$0xff]
  %v328 = vld [vmem:[%s2 + $0x178] sm:$0xff]
  %v329 = vld [vmem:[%s2 + $0x180] sm:$0xff]
  %v330 = vld [vmem:[%s2 + $0x188] sm:$0xff]
  %v331 = vld [vmem:[%s2 + $0x190] sm:$0xff]
  %v332 = vld [vmem:[%s2 + $0x198] sm:$0xff]
  %v333 = vld [vmem:[%s2 + $0x1a0] sm:$0xff]
  %v334 = vld [vmem:[%s2 + $0x1a8] sm:$0xff]
  %v335 = vld [vmem:[%s2 + $0x1b0] sm:$0xff]
  %v336 = vld [vmem:[%s2 + $0x1b8] sm:$0xff]
  %v337 = vld [vmem:[%s2 + $0x1c0] sm:$0xff]
  %v338 = vld [vmem:[%s2 + $0x1c8] sm:$0xff]
  %v339 = vld [vmem:[%s2 + $0x1d0] sm:$0xff]
  %v340 = vld [vmem:[%s2 + $0x1d8] sm:$0xff]
  %v341 = vld [vmem:[%s2 + $0x1e0] sm:$0xff]
  %v342 = vld [vmem:[%s2 + $0x1e8] sm:$0xff]
  %v343 = vld [vmem:[%s2 + $0x1f0] sm:$0xff]
  %v344 = vld [vmem:[%s2 + $0x1f8] sm:$0xff]
  %v345 = vld [vmem:[%s2 + $0x200] sm:$0xff]
  %v346 = vld [vmem:[%s2 + $0x208] sm:$0xff]
  %v347 = vld [vmem:[%s2 + $0x210] sm:$0xff]
  %v348 = vld [vmem:[%s2 + $0x218] sm:$0xff]
  %v349 = vld [vmem:[%s2 + $0x220] sm:$0xff]
  %v350 = vld [vmem:[%s2 + $0x228] sm:$0xff]
  %v351 = vld [vmem:[%s2 + $0x230] sm:$0xff]
  %v352 = vld [vmem:[%s2 + $0x238] sm:$0xff]
  %v353 = vld [vmem:[%s2 + $0x240] sm:$0xff]
  %v354 = vld [vmem:[%s2 + $0x248] sm:$0xff]
  %v355 = vld [vmem:[%s2 + $0x250] sm:$0xff]
  %v356 = vld [vmem:[%s2 + $0x258] sm:$0xff]
  %v357 = vld [vmem:[%s2 + $0x260] sm:$0xff]
  %v358 = vld [vmem:[%s2 + $0x268] sm:$0xff]
  %v359 = vld [vmem:[%s2 + $0x270] sm:$0xff]
  %v360 = vld [vmem:[%s2 + $0x278] sm:$0xff]
  %v361 = vld [vmem:[%s2 + $0x280] sm:$0xff]
  %v362 = vld [vmem:[%s2 + $0x288] sm:$0xff]
  %v363 = vld [vmem:[%s2 + $0x290] sm:$0xff]
  %v364 = vld [vmem:[%s2 + $0x298] sm:$0xff]
  %v365 = vld [vmem:[%s2 + $0x2a0] sm:$0xff]
  %v366 = vld [vmem:[%s2 + $0x2a8] sm:$0xff]
  %v367 = vld [vmem:[%s2 + $0x2b0] sm:$0xff]
  %v368 = vld [vmem:[%s2 + $0x2b8] sm:$0xff]
  %v369 = vld [vmem:[%s2 + $0x2c0] sm:$0xff]
  %v370 = vld [vmem:[%s2 + $0x2c8] sm:$0xff]
  %v371 = vld [vmem:[%s2 + $0x2d0] sm:$0xff]
  %v372 = vld [vmem:[%s2 + $0x2d8] sm:$0xff]
  %v373 = vld [vmem:[%s2 + $0x2e0] sm:$0xff]
  %v374 = vld [vmem:[%s2 + $0x2e8] sm:$0xff]
  %v375 = vld [vmem:[%s2 + $0x2f0] sm:$0xff]
  %v376 = vld [vmem:[%s2 + $0x2f8] sm:$0xff]
  %v377 = vld [vmem:[%s2 + $0x300] sm:$0xff]
  %v378 = vld [vmem:[%s2 + $0x308] sm:$0xff]
  %v379 = vld [vmem:[%s2 + $0x310] sm:$0xff]
  %v380 = vld [vmem:[%s2 + $0x318] sm:$0xff]
  %v381 = vld [vmem:[%s2 + $0x320] sm:$0xff]
  %v382 = vld [vmem:[%s2 + $0x328] sm:$0xff]
  %v383 = vld [vmem:[%s2 + $0x330] sm:$0xff]
  %v384 = vld [vmem:[%s2 + $0x338] sm:$0xff]
  %v385 = vld [vmem:[%s2 + $0x340] sm:$0xff]
  %v386 = vld [vmem:[%s2 + $0x348] sm:$0xff]
  %v387 = vld [vmem:[%s2 + $0x350] sm:$0xff]
  %v388 = vld [vmem:[%s2 + $0x358] sm:$0xff]
  %v389 = vld [vmem:[%s2 + $0x360] sm:$0xff]
  %v390 = vld [vmem:[%s2 + $0x368] sm:$0xff]
  %v391 = vld [vmem:[%s2 + $0x370] sm:$0xff]
  %v392 = vld [vmem:[%s2 + $0x378] sm:$0xff]
  %v393 = vld [vmem:[%s2 + $0x380] sm:$0xff]
  %v394 = vld [vmem:[%s2 + $0x388] sm:$0xff]
  %v395 = vld [vmem:[%s2 + $0x390] sm:$0xff]
  %v396 = vld [vmem:[%s2 + $0x398] sm:$0xff]
  %v397 = vld [vmem:[%s2 + $0x3a0] sm:$0xff]
  %v398 = vld [vmem:[%s2 + $0x3a8] sm:$0xff]
  %v399 = vld [vmem:[%s2 + $0x3b0] sm:$0xff]
  %v400 = vld [vmem:[%s2 + $0x3b8] sm:$0xff]
  %v401 = vld [vmem:[%s2 + $0x3c0] sm:$0xff]
  %v402 = vld [vmem:[%s2 + $0x3c8] sm:$0xff]
  %v403 = vld [vmem:[%s2 + $0x3d0] sm:$0xff]
  %v404 = vld [vmem:[%s2 + $0x3d8] sm:$0xff]
  %v405 = vld [vmem:[%s2 + $0x3e0] sm:$0xff]
  %v406 = vld [vmem:[%s2 + $0x3e8] sm:$0xff]
  %v407 = vld [vmem:[%s2 + $0x3f0] sm:$0xff]
  %v408 = vld [vmem:[%s2 + $0x3f8] sm:$0xff]
  %v409 = vld [vmem:[%s3] sm:$0xf]
  %v411 = vlaneseq
  %v412 = vshrl.u32 %v411, 7
  %v413 = vsub.s32 0, %v412
  %v414 = vrot.slane %v409, %v413
  %v415 = vlaneseq
  %v416 = vshrl.u32 %v415, 7
  %v417 = vsub.s32 1, %v416
  %v418 = vrot.slane %v409, %v417
  %v419 = vlaneseq
  %v420 = vshrl.u32 %v419, 7
  %v421 = vsub.s32 2, %v420
  %v422 = vrot.slane %v409, %v421
  %v423 = vlaneseq
  %v424 = vshrl.u32 %v423, 7
  %v425 = vsub.s32 3, %v424
  %v426 = vrot.slane %v409, %v425
  %v559 = vunpack.c.l.b16 %v281
  %v560 = vunpack.c.h.b16 %v281
  %v561 = vunpack.c.l.b16 %v282
  %v562 = vunpack.c.h.b16 %v282
  %v563 = vunpack.c.l.b16 %v283
  %v564 = vunpack.c.h.b16 %v283
  %v565 = vunpack.c.l.b16 %v284
  %v566 = vunpack.c.h.b16 %v284
  %v567 = vunpack.c.l.b16 %v285
  %v568 = vunpack.c.h.b16 %v285
  %v569 = vunpack.c.l.b16 %v286
  %v570 = vunpack.c.h.b16 %v286
  %v571 = vunpack.c.l.b16 %v287
  %v572 = vunpack.c.h.b16 %v287
  %v573 = vunpack.c.l.b16 %v288
  %v574 = vunpack.c.h.b16 %v288
  %v575 = vunpack.c.l.b16 %v289
  %v576 = vunpack.c.h.b16 %v289
  %v577 = vunpack.c.l.b16 %v290
  %v578 = vunpack.c.h.b16 %v290
  %v579 = vunpack.c.l.b16 %v291
  %v580 = vunpack.c.h.b16 %v291
  %v581 = vunpack.c.l.b16 %v292
  %v582 = vunpack.c.h.b16 %v292
  %v583 = vunpack.c.l.b16 %v293
  %v584 = vunpack.c.h.b16 %v293
  %v585 = vunpack.c.l.b16 %v294
  %v586 = vunpack.c.h.b16 %v294
  %v587 = vunpack.c.l.b16 %v295
  %v588 = vunpack.c.h.b16 %v295
  %v589 = vunpack.c.l.b16 %v296
  %v590 = vunpack.c.h.b16 %v296
  %v591 = vunpack.c.l.b16 %v297
  %v592 = vunpack.c.h.b16 %v297
  %v593 = vunpack.c.l.b16 %v298
  %v594 = vunpack.c.h.b16 %v298
  %v595 = vunpack.c.l.b16 %v299
  %v596 = vunpack.c.h.b16 %v299
  %v597 = vunpack.c.l.b16 %v300
  %v598 = vunpack.c.h.b16 %v300
  %v599 = vunpack.c.l.b16 %v301
  %v600 = vunpack.c.h.b16 %v301
  %v601 = vunpack.c.l.b16 %v302
  %v602 = vunpack.c.h.b16 %v302
  %v603 = vunpack.c.l.b16 %v303
  %v604 = vunpack.c.h.b16 %v303
  %v605 = vunpack.c.l.b16 %v304
  %v606 = vunpack.c.h.b16 %v304
  %v607 = vunpack.c.l.b16 %v305
  %v608 = vunpack.c.h.b16 %v305
  %v609 = vunpack.c.l.b16 %v306
  %v610 = vunpack.c.h.b16 %v306
  %v611 = vunpack.c.l.b16 %v307
  %v612 = vunpack.c.h.b16 %v307
  %v613 = vunpack.c.l.b16 %v308
  %v614 = vunpack.c.h.b16 %v308
  %v615 = vunpack.c.l.b16 %v309
  %v616 = vunpack.c.h.b16 %v309
  %v617 = vunpack.c.l.b16 %v310
  %v618 = vunpack.c.h.b16 %v310
  %v619 = vunpack.c.l.b16 %v311
  %v620 = vunpack.c.h.b16 %v311
  %v621 = vunpack.c.l.b16 %v312
  %v622 = vunpack.c.h.b16 %v312
  %v623 = vunpack.c.l.b16 %v313
  %v624 = vunpack.c.h.b16 %v313
  %v625 = vunpack.c.l.b16 %v314
  %v626 = vunpack.c.h.b16 %v314
  %v627 = vunpack.c.l.b16 %v315
  %v628 = vunpack.c.h.b16 %v315
  %v629 = vunpack.c.l.b16 %v316
  %v630 = vunpack.c.h.b16 %v316
  %v631 = vunpack.c.l.b16 %v317
  %v632 = vunpack.c.h.b16 %v317
  %v633 = vunpack.c.l.b16 %v318
  %v634 = vunpack.c.h.b16 %v318
  %v635 = vunpack.c.l.b16 %v319
  %v636 = vunpack.c.h.b16 %v319
  %v637 = vunpack.c.l.b16 %v320
  %v638 = vunpack.c.h.b16 %v320
  %v639 = vunpack.c.l.b16 %v321
  %v640 = vunpack.c.h.b16 %v321
  %v641 = vunpack.c.l.b16 %v322
  %v642 = vunpack.c.h.b16 %v322
  %v643 = vunpack.c.l.b16 %v323
  %v644 = vunpack.c.h.b16 %v323
  %v645 = vunpack.c.l.b16 %v324
  %v646 = vunpack.c.h.b16 %v324
  %v647 = vunpack.c.l.b16 %v325
  %v648 = vunpack.c.h.b16 %v325
  %v649 = vunpack.c.l.b16 %v326
  %v650 = vunpack.c.h.b16 %v326
  %v651 = vunpack.c.l.b16 %v327
  %v652 = vunpack.c.h.b16 %v327
  %v653 = vunpack.c.l.b16 %v328
  %v654 = vunpack.c.h.b16 %v328
  %v655 = vunpack.c.l.b16 %v329
  %v656 = vunpack.c.h.b16 %v329
  %v657 = vunpack.c.l.b16 %v330
  %v658 = vunpack.c.h.b16 %v330
  %v659 = vunpack.c.l.b16 %v331
  %v660 = vunpack.c.h.b16 %v331
  %v661 = vunpack.c.l.b16 %v332
  %v662 = vunpack.c.h.b16 %v332
  %v663 = vunpack.c.l.b16 %v333
  %v664 = vunpack.c.h.b16 %v333
  %v665 = vunpack.c.l.b16 %v334
  %v666 = vunpack.c.h.b16 %v334
  %v667 = vunpack.c.l.b16 %v335
  %v668 = vunpack.c.h.b16 %v335
  %v669 = vunpack.c.l.b16 %v336
  %v670 = vunpack.c.h.b16 %v336
  %v671 = vunpack.c.l.b16 %v337
  %v672 = vunpack.c.h.b16 %v337
  %v673 = vunpack.c.l.b16 %v338
  %v674 = vunpack.c.h.b16 %v338
  %v675 = vunpack.c.l.b16 %v339
  %v676 = vunpack.c.h.b16 %v339
  %v677 = vunpack.c.l.b16 %v340
  %v678 = vunpack.c.h.b16 %v340
  %v679 = vunpack.c.l.b16 %v341
  %v680 = vunpack.c.h.b16 %v341
  %v681 = vunpack.c.l.b16 %v342
  %v682 = vunpack.c.h.b16 %v342
  %v683 = vunpack.c.l.b16 %v343
  %v684 = vunpack.c.h.b16 %v343
  %v685 = vunpack.c.l.b16 %v344
  %v686 = vunpack.c.h.b16 %v344
  %v687 = vunpack.c.l.b16 %v345
  %v688 = vunpack.c.h.b16 %v345
  %v689 = vunpack.c.l.b16 %v346
  %v690 = vunpack.c.h.b16 %v346
  %v691 = vunpack.c.l.b16 %v347
  %v692 = vunpack.c.h.b16 %v347
  %v693 = vunpack.c.l.b16 %v348
  %v694 = vunpack.c.h.b16 %v348
  %v695 = vunpack.c.l.b16 %v349
  %v696 = vunpack.c.h.b16 %v349
  %v697 = vunpack.c.l.b16 %v350
  %v698 = vunpack.c.h.b16 %v350
  %v699 = vunpack.c.l.b16 %v351
  %v700 = vunpack.c.h.b16 %v351
  %v701 = vunpack.c.l.b16 %v352
  %v702 = vunpack.c.h.b16 %v352
  %v703 = vunpack.c.l.b16 %v353
  %v704 = vunpack.c.h.b16 %v353
  %v705 = vunpack.c.l.b16 %v354
  %v706 = vunpack.c.h.b16 %v354
  %v707 = vunpack.c.l.b16 %v355
  %v708 = vunpack.c.h.b16 %v355
  %v709 = vunpack.c.l.b16 %v356
  %v710 = vunpack.c.h.b16 %v356
  %v711 = vunpack.c.l.b16 %v357
  %v712 = vunpack.c.h.b16 %v357
  %v713 = vunpack.c.l.b16 %v358
  %v714 = vunpack.c.h.b16 %v358
  %v715 = vunpack.c.l.b16 %v359
  %v716 = vunpack.c.h.b16 %v359
  %v717 = vunpack.c.l.b16 %v360
  %v718 = vunpack.c.h.b16 %v360
  %v719 = vunpack.c.l.b16 %v361
  %v720 = vunpack.c.h.b16 %v361
  %v721 = vunpack.c.l.b16 %v362
  %v722 = vunpack.c.h.b16 %v362
  %v723 = vunpack.c.l.b16 %v363
  %v724 = vunpack.c.h.b16 %v363
  %v725 = vunpack.c.l.b16 %v364
  %v726 = vunpack.c.h.b16 %v364
  %v727 = vunpack.c.l.b16 %v365
  %v728 = vunpack.c.h.b16 %v365
  %v729 = vunpack.c.l.b16 %v366
  %v730 = vunpack.c.h.b16 %v366
  %v731 = vunpack.c.l.b16 %v367
  %v732 = vunpack.c.h.b16 %v367
  %v733 = vunpack.c.l.b16 %v368
  %v734 = vunpack.c.h.b16 %v368
  %v735 = vunpack.c.l.b16 %v369
  %v736 = vunpack.c.h.b16 %v369
  %v737 = vunpack.c.l.b16 %v370
  %v738 = vunpack.c.h.b16 %v370
  %v739 = vunpack.c.l.b16 %v371
  %v740 = vunpack.c.h.b16 %v371
  %v741 = vunpack.c.l.b16 %v372
  %v742 = vunpack.c.h.b16 %v372
  %v743 = vunpack.c.l.b16 %v373
  %v744 = vunpack.c.h.b16 %v373
  %v745 = vunpack.c.l.b16 %v374
  %v746 = vunpack.c.h.b16 %v374
  %v747 = vunpack.c.l.b16 %v375
  %v748 = vunpack.c.h.b16 %v375
  %v749 = vunpack.c.l.b16 %v376
  %v750 = vunpack.c.h.b16 %v376
  %v751 = vunpack.c.l.b16 %v377
  %v752 = vunpack.c.h.b16 %v377
  %v753 = vunpack.c.l.b16 %v378
  %v754 = vunpack.c.h.b16 %v378
  %v755 = vunpack.c.l.b16 %v379
  %v756 = vunpack.c.h.b16 %v379
  %v757 = vunpack.c.l.b16 %v380
  %v758 = vunpack.c.h.b16 %v380
  %v759 = vunpack.c.l.b16 %v381
  %v760 = vunpack.c.h.b16 %v381
  %v761 = vunpack.c.l.b16 %v382
  %v762 = vunpack.c.h.b16 %v382
  %v763 = vunpack.c.l.b16 %v383
  %v764 = vunpack.c.h.b16 %v383
  %v765 = vunpack.c.l.b16 %v384
  %v766 = vunpack.c.h.b16 %v384
  %v767 = vunpack.c.l.b16 %v385
  %v768 = vunpack.c.h.b16 %v385
  %v769 = vunpack.c.l.b16 %v386
  %v770 = vunpack.c.h.b16 %v386
  %v771 = vunpack.c.l.b16 %v387
  %v772 = vunpack.c.h.b16 %v387
  %v773 = vunpack.c.l.b16 %v388
  %v774 = vunpack.c.h.b16 %v388
  %v775 = vunpack.c.l.b16 %v389
  %v776 = vunpack.c.h.b16 %v389
  %v777 = vunpack.c.l.b16 %v390
  %v778 = vunpack.c.h.b16 %v390
  %v779 = vunpack.c.l.b16 %v391
  %v780 = vunpack.c.h.b16 %v391
  %v781 = vunpack.c.l.b16 %v392
  %v782 = vunpack.c.h.b16 %v392
  %v783 = vunpack.c.l.b16 %v393
  %v784 = vunpack.c.h.b16 %v393
  %v785 = vunpack.c.l.b16 %v394
  %v786 = vunpack.c.h.b16 %v394
  %v787 = vunpack.c.l.b16 %v395
  %v788 = vunpack.c.h.b16 %v395
  %v789 = vunpack.c.l.b16 %v396
  %v790 = vunpack.c.h.b16 %v396
  %v791 = vunpack.c.l.b16 %v397
  %v792 = vunpack.c.h.b16 %v397
  %v793 = vunpack.c.l.b16 %v398
  %v794 = vunpack.c.h.b16 %v398
  %v795 = vunpack.c.l.b16 %v399
  %v796 = vunpack.c.h.b16 %v399
  %v797 = vunpack.c.l.b16 %v400
  %v798 = vunpack.c.h.b16 %v400
  %v799 = vunpack.c.l.b16 %v401
  %v800 = vunpack.c.h.b16 %v401
  %v801 = vunpack.c.l.b16 %v402
  %v802 = vunpack.c.h.b16 %v402
  %v803 = vunpack.c.l.b16 %v403
  %v804 = vunpack.c.h.b16 %v403
  %v805 = vunpack.c.l.b16 %v404
  %v806 = vunpack.c.h.b16 %v404
  %v807 = vunpack.c.l.b16 %v405
  %v808 = vunpack.c.h.b16 %v405
  %v809 = vunpack.c.l.b16 %v406
  %v810 = vunpack.c.h.b16 %v406
  %v811 = vunpack.c.l.b16 %v407
  %v812 = vunpack.c.h.b16 %v407
  %v813 = vunpack.c.l.b16 %v408
  %v814 = vunpack.c.h.b16 %v408
  %v815 = vpack.c.b16 %v563, %v559
  %v816 = vpack.c.b16 %v564, %v560
  %v817 = vpack.c.b16 %v565, %v561
  %v818 = vpack.c.b16 %v566, %v562
  %v819 = vpack.c.b16 %v571, %v567
  %v820 = vpack.c.b16 %v572, %v568
  %v821 = vpack.c.b16 %v573, %v569
  %v822 = vpack.c.b16 %v574, %v570
  %v823 = vpack.c.b16 %v579, %v575
  %v824 = vpack.c.b16 %v580, %v576
  %v825 = vpack.c.b16 %v581, %v577
  %v826 = vpack.c.b16 %v582, %v578
  %v827 = vpack.c.b16 %v587, %v583
  %v828 = vpack.c.b16 %v588, %v584
  %v829 = vpack.c.b16 %v589, %v585
  %v830 = vpack.c.b16 %v590, %v586
  %v831 = vpack.c.b16 %v595, %v591
  %v832 = vpack.c.b16 %v596, %v592
  %v833 = vpack.c.b16 %v597, %v593
  %v834 = vpack.c.b16 %v598, %v594
  %v835 = vpack.c.b16 %v603, %v599
  %v836 = vpack.c.b16 %v604, %v600
  %v837 = vpack.c.b16 %v605, %v601
  %v838 = vpack.c.b16 %v606, %v602
  %v839 = vpack.c.b16 %v611, %v607
  %v840 = vpack.c.b16 %v612, %v608
  %v841 = vpack.c.b16 %v613, %v609
  %v842 = vpack.c.b16 %v614, %v610
  %v843 = vpack.c.b16 %v619, %v615
  %v844 = vpack.c.b16 %v620, %v616
  %v845 = vpack.c.b16 %v621, %v617
  %v846 = vpack.c.b16 %v622, %v618
  %v847 = vpack.c.b16 %v627, %v623
  %v848 = vpack.c.b16 %v628, %v624
  %v849 = vpack.c.b16 %v629, %v625
  %v850 = vpack.c.b16 %v630, %v626
  %v851 = vpack.c.b16 %v635, %v631
  %v852 = vpack.c.b16 %v636, %v632
  %v853 = vpack.c.b16 %v637, %v633
  %v854 = vpack.c.b16 %v638, %v634
  %v855 = vpack.c.b16 %v643, %v639
  %v856 = vpack.c.b16 %v644, %v640
  %v857 = vpack.c.b16 %v645, %v641
  %v858 = vpack.c.b16 %v646, %v642
  %v859 = vpack.c.b16 %v651, %v647
  %v860 = vpack.c.b16 %v652, %v648
  %v861 = vpack.c.b16 %v653, %v649
  %v862 = vpack.c.b16 %v654, %v650
  %v863 = vpack.c.b16 %v659, %v655
  %v864 = vpack.c.b16 %v660, %v656
  %v865 = vpack.c.b16 %v661, %v657
  %v866 = vpack.c.b16 %v662, %v658
  %v867 = vpack.c.b16 %v667, %v663
  %v868 = vpack.c.b16 %v668, %v664
  %v869 = vpack.c.b16 %v669, %v665
  %v870 = vpack.c.b16 %v670, %v666
  %v871 = vpack.c.b16 %v675, %v671
  %v872 = vpack.c.b16 %v676, %v672
  %v873 = vpack.c.b16 %v677, %v673
  %v874 = vpack.c.b16 %v678, %v674
  %v875 = vpack.c.b16 %v683, %v679
  %v876 = vpack.c.b16 %v684, %v680
  %v877 = vpack.c.b16 %v685, %v681
  %v878 = vpack.c.b16 %v686, %v682
  %v879 = vpack.c.b16 %v691, %v687
  %v880 = vpack.c.b16 %v692, %v688
  %v881 = vpack.c.b16 %v693, %v689
  %v882 = vpack.c.b16 %v694, %v690
  %v883 = vpack.c.b16 %v699, %v695
  %v884 = vpack.c.b16 %v700, %v696
  %v885 = vpack.c.b16 %v701, %v697
  %v886 = vpack.c.b16 %v702, %v698
  %v887 = vpack.c.b16 %v707, %v703
  %v888 = vpack.c.b16 %v708, %v704
  %v889 = vpack.c.b16 %v709, %v705
  %v890 = vpack.c.b16 %v710, %v706
  %v891 = vpack.c.b16 %v715, %v711
  %v892 = vpack.c.b16 %v716, %v712
  %v893 = vpack.c.b16 %v717, %v713
  %v894 = vpack.c.b16 %v718, %v714
  %v895 = vpack.c.b16 %v723, %v719
  %v896 = vpack.c.b16 %v724, %v720
  %v897 = vpack.c.b16 %v725, %v721
  %v898 = vpack.c.b16 %v726, %v722
  %v899 = vpack.c.b16 %v731, %v727
  %v900 = vpack.c.b16 %v732, %v728
  %v901 = vpack.c.b16 %v733, %v729
  %v902 = vpack.c.b16 %v734, %v730
  %v903 = vpack.c.b16 %v739, %v735
  %v904 = vpack.c.b16 %v740, %v736
  %v905 = vpack.c.b16 %v741, %v737
  %v906 = vpack.c.b16 %v742, %v738
  %v907 = vpack.c.b16 %v747, %v743
  %v908 = vpack.c.b16 %v748, %v744
  %v909 = vpack.c.b16 %v749, %v745
  %v910 = vpack.c.b16 %v750, %v746
  %v911 = vpack.c.b16 %v755, %v751
  %v912 = vpack.c.b16 %v756, %v752
  %v913 = vpack.c.b16 %v757, %v753
  %v914 = vpack.c.b16 %v758, %v754
  %v915 = vpack.c.b16 %v763, %v759
  %v916 = vpack.c.b16 %v764, %v760
  %v917 = vpack.c.b16 %v765, %v761
  %v918 = vpack.c.b16 %v766, %v762
  %v919 = vpack.c.b16 %v771, %v767
  %v920 = vpack.c.b16 %v772, %v768
  %v921 = vpack.c.b16 %v773, %v769
  %v922 = vpack.c.b16 %v774, %v770
  %v923 = vpack.c.b16 %v779, %v775
  %v924 = vpack.c.b16 %v780, %v776
  %v925 = vpack.c.b16 %v781, %v777
  %v926 = vpack.c.b16 %v782, %v778
  %v927 = vpack.c.b16 %v787, %v783
  %v928 = vpack.c.b16 %v788, %v784
  %v929 = vpack.c.b16 %v789, %v785
  %v930 = vpack.c.b16 %v790, %v786
  %v931 = vpack.c.b16 %v795, %v791
  %v932 = vpack.c.b16 %v796, %v792
  %v933 = vpack.c.b16 %v797, %v793
  %v934 = vpack.c.b16 %v798, %v794
  %v935 = vpack.c.b16 %v803, %v799
  %v936 = vpack.c.b16 %v804, %v800
  %v937 = vpack.c.b16 %v805, %v801
  %v938 = vpack.c.b16 %v806, %v802
  %v939 = vpack.c.b16 %v811, %v807
  %v940 = vpack.c.b16 %v812, %v808
  %v941 = vpack.c.b16 %v813, %v809
  %v942 = vpack.c.b16 %v814, %v810
  %1071 = vmatprep.subr.bf16.mxu0 %v844
  %1072 = vmatpush1.bf16.msra.mxu0 %v843
  %1073 = vmatprep.subr.bf16.mxu0 %v840
  %1074 = vmatpush1.bf16.msra.mxu0 %v839
  %1075 = vmatprep.subr.bf16.mxu0 %v836
  %1076 = vmatpush1.bf16.msra.mxu0 %v835
  %1077 = vmatprep.subr.bf16.mxu0 %v832
  %1078 = vmatpush1.bf16.msra.mxu0 %v831
  %1079 = vmatprep.subr.bf16.mxu0 %v828
  %1080 = vmatpush1.bf16.msra.mxu0 %v827
  %1081 = vmatprep.subr.bf16.mxu0 %v824
  %1082 = vmatpush1.bf16.msra.mxu0 %v823
  %1083 = vmatprep.subr.bf16.mxu0 %v820
  %1084 = vmatpush1.bf16.msra.mxu0 %v819
  %1085 = vmatprep.subr.bf16.mxu0 %v816
  %1086 = vmatpush1.bf16.msra.mxu0 %v815
  %1087 = vmatprep.subr.bf16.mxu0 %v876
  %1088 = vmatpush2.bf16.msra.mxu0 %v875
  %1089 = vmatprep.subr.bf16.mxu0 %v872
  %1090 = vmatpush2.bf16.msra.mxu0 %v871
  %1091 = vmatprep.subr.bf16.mxu0 %v868
  %1092 = vmatpush2.bf16.msra.mxu0 %v867
  %1093 = vmatprep.subr.bf16.mxu0 %v864
  %1094 = vmatpush2.bf16.msra.mxu0 %v863
  %1095 = vmatprep.subr.bf16.mxu0 %v860
  %1096 = vmatpush2.bf16.msra.mxu0 %v859
  %1097 = vmatprep.subr.bf16.mxu0 %v856
  %1098 = vmatpush2.bf16.msra.mxu0 %v855
  %1099 = vmatprep.subr.bf16.mxu0 %v852
  %1100 = vmatpush2.bf16.msra.mxu0 %v851
  %1101 = vmatprep.subr.bf16.mxu0 %v848
  %1102 = vmatpush2.bf16.msra.mxu0 %v847
  %1103 = vmatprep.mubr.bf16.mxu0 %v278
  %1104 = vmatmul.mubr.bf16.gmra.mxu0 %v277
  %v1105 = vpop.f32.mrf.mxu0
  %v1106 = vadd.f32 %v414, %v1105
  %v1107 = vpop.f32.mrf.mxu0
  %v1108 = vadd.f32 %v418, %v1107
  %v1109 = vpop.f32.mrf.mxu0
  %v1110 = vadd.f32 %v414, %v1109
  %v1111 = vpop.f32.mrf.mxu0
  %v1112 = vadd.f32 %v418, %v1111
  %1113 = vdwg.mxu0
  %1114 = vmatprep.subr.bf16.mxu0 %v908
  %1115 = vmatpush1.bf16.msra.mxu0 %v907
  %1116 = vmatprep.subr.bf16.mxu0 %v904
  %1117 = vmatpush1.bf16.msra.mxu0 %v903
  %1118 = vmatprep.subr.bf16.mxu0 %v900
  %1119 = vmatpush1.bf16.msra.mxu0 %v899
  %1120 = vmatprep.subr.bf16.mxu0 %v896
  %1121 = vmatpush1.bf16.msra.mxu0 %v895
  %1122 = vmatprep.subr.bf16.mxu0 %v892
  %1123 = vmatpush1.bf16.msra.mxu0 %v891
  %1124 = vmatprep.subr.bf16.mxu0 %v888
  %1125 = vmatpush1.bf16.msra.mxu0 %v887
  %1126 = vmatprep.subr.bf16.mxu0 %v884
  %1127 = vmatpush1.bf16.msra.mxu0 %v883
  %1128 = vmatprep.subr.bf16.mxu0 %v880
  %1129 = vmatpush1.bf16.msra.mxu0 %v879
  %1130 = vmatprep.subr.bf16.mxu0 %v940
  %1131 = vmatpush2.bf16.msra.mxu0 %v939
  %1132 = vmatprep.subr.bf16.mxu0 %v936
  %1133 = vmatpush2.bf16.msra.mxu0 %v935
  %1134 = vmatprep.subr.bf16.mxu0 %v932
  %1135 = vmatpush2.bf16.msra.mxu0 %v931
  %1136 = vmatprep.subr.bf16.mxu0 %v928
  %1137 = vmatpush2.bf16.msra.mxu0 %v927
  %1138 = vmatprep.subr.bf16.mxu0 %v924
  %1139 = vmatpush2.bf16.msra.mxu0 %v923
  %1140 = vmatprep.subr.bf16.mxu0 %v920
  %1141 = vmatpush2.bf16.msra.mxu0 %v919
  %1142 = vmatprep.subr.bf16.mxu0 %v916
  %1143 = vmatpush2.bf16.msra.mxu0 %v915
  %1144 = vmatprep.subr.bf16.mxu0 %v912
  %1145 = vmatpush2.bf16.msra.mxu0 %v911
  %1146 = vmatprep.mubr.bf16.mxu0 %v280
  %1147 = vmatmul.mubr.bf16.gmra.mxu0 %v279
  %v1148 = vpop.f32.mrf.mxu0
  %v1149 = vadd.f32 %v1106, %v1148
  %v1150 = vpop.f32.mrf.mxu0
  %v1151 = vadd.f32 %v1108, %v1150
  %v1152 = vpop.f32.mrf.mxu0
  %v1153 = vadd.f32 %v1110, %v1152
  %v1154 = vpop.f32.mrf.mxu0
  %v1155 = vadd.f32 %v1112, %v1154
  %1156 = vdwg.mxu0
  %1157 = vmatprep.subr.bf16.mxu0 %v846
  %1158 = vmatpush1.bf16.msra.mxu0 %v845
  %1159 = vmatprep.subr.bf16.mxu0 %v842
  %1160 = vmatpush1.bf16.msra.mxu0 %v841
  %1161 = vmatprep.subr.bf16.mxu0 %v838
  %1162 = vmatpush1.bf16.msra.mxu0 %v837
  %1163 = vmatprep.subr.bf16.mxu0 %v834
  %1164 = vmatpush1.bf16.msra.mxu0 %v833
  %1165 = vmatprep.subr.bf16.mxu0 %v830
  %1166 = vmatpush1.bf16.msra.mxu0 %v829
  %1167 = vmatprep.subr.bf16.mxu0 %v826
  %1168 = vmatpush1.bf16.msra.mxu0 %v825
  %1169 = vmatprep.subr.bf16.mxu0 %v822
  %1170 = vmatpush1.bf16.msra.mxu0 %v821
  %1171 = vmatprep.subr.bf16.mxu0 %v818
  %1172 = vmatpush1.bf16.msra.mxu0 %v817
  %1173 = vmatprep.subr.bf16.mxu0 %v878
  %1174 = vmatpush2.bf16.msra.mxu0 %v877
  %1175 = vmatprep.subr.bf16.mxu0 %v874
  %1176 = vmatpush2.bf16.msra.mxu0 %v873
  %1177 = vmatprep.subr.bf16.mxu0 %v870
  %1178 = vmatpush2.bf16.msra.mxu0 %v869
  %1179 = vmatprep.subr.bf16.mxu0 %v866
  %1180 = vmatpush2.bf16.msra.mxu0 %v865
  %1181 = vmatprep.subr.bf16.mxu0 %v862
  %1182 = vmatpush2.bf16.msra.mxu0 %v861
  %1183 = vmatprep.subr.bf16.mxu0 %v858
  %1184 = vmatpush2.bf16.msra.mxu0 %v857
  %1185 = vmatprep.subr.bf16.mxu0 %v854
  %1186 = vmatpush2.bf16.msra.mxu0 %v853
  %1187 = vmatprep.subr.bf16.mxu0 %v850
  %1188 = vmatpush2.bf16.msra.mxu0 %v849
  %1189 = vmatprep.mubr.bf16.mxu0 %v278
  %1190 = vmatmul.mubr.bf16.gmra.mxu0 %v277
  %v1191 = vpop.f32.mrf.mxu0
  %v1192 = vadd.f32 %v422, %v1191
  %v1193 = vpop.f32.mrf.mxu0
  %v1194 = vadd.f32 %v426, %v1193
  %v1195 = vpop.f32.mrf.mxu0
  %v1196 = vadd.f32 %v422, %v1195
  %v1197 = vpop.f32.mrf.mxu0
  %v1198 = vadd.f32 %v426, %v1197
  %1199 = vdwg.mxu0
  %1200 = vmatprep.subr.bf16.mxu0 %v910
  %1201 = vmatpush1.bf16.msra.mxu0 %v909
  %1202 = vmatprep.subr.bf16.mxu0 %v906
  %1203 = vmatpush1.bf16.msra.mxu0 %v905
  %1204 = vmatprep.subr.bf16.mxu0 %v902
  %1205 = vmatpush1.bf16.msra.mxu0 %v901
  %1206 = vmatprep.subr.bf16.mxu0 %v898
  %1207 = vmatpush1.bf16.msra.mxu0 %v897
  %1208 = vmatprep.subr.bf16.mxu0 %v894
  %1209 = vmatpush1.bf16.msra.mxu0 %v893
  %1210 = vmatprep.subr.bf16.mxu0 %v890
  %1211 = vmatpush1.bf16.msra.mxu0 %v889
  %1212 = vmatprep.subr.bf16.mxu0 %v886
  %1213 = vmatpush1.bf16.msra.mxu0 %v885
  %1214 = vmatprep.subr.bf16.mxu0 %v882
  %1215 = vmatpush1.bf16.msra.mxu0 %v881
  %1216 = vmatprep.subr.bf16.mxu0 %v942
  %1217 = vmatpush2.bf16.msra.mxu0 %v941
  %1218 = vmatprep.subr.bf16.mxu0 %v938
  %1219 = vmatpush2.bf16.msra.mxu0 %v937
  %1220 = vmatprep.subr.bf16.mxu0 %v934
  %1221 = vmatpush2.bf16.msra.mxu0 %v933
  %1222 = vmatprep.subr.bf16.mxu0 %v930
  %1223 = vmatpush2.bf16.msra.mxu0 %v929
  %1224 = vmatprep.subr.bf16.mxu0 %v926
  %1225 = vmatpush2.bf16.msra.mxu0 %v925
  %1226 = vmatprep.subr.bf16.mxu0 %v922
  %1227 = vmatpush2.bf16.msra.mxu0 %v921
  %1228 = vmatprep.subr.bf16.mxu0 %v918
  %1229 = vmatpush2.bf16.msra.mxu0 %v917
  %1230 = vmatprep.subr.bf16.mxu0 %v914
  %1231 = vmatpush2.bf16.msra.mxu0 %v913
  %1232 = vmatprep.mubr.bf16.mxu0 %v280
  %1233 = vmatmul.mubr.bf16.gmra.mxu0 %v279
  %v1234 = vpop.f32.mrf.mxu0
  %v1235 = vadd.f32 %v1192, %v1234
  %v1236 = vpop.f32.mrf.mxu0
  %v1237 = vadd.f32 %v1194, %v1236
  %v1238 = vpop.f32.mrf.mxu0
  %v1239 = vadd.f32 %v1196, %v1238
  %v1240 = vpop.f32.mrf.mxu0
  %v1241 = vadd.f32 %v1198, %v1240
  %1242 = vdwg.mxu0
  %v1243 = vmax.f32 %v1149, %v1235
  %v1244 = vmax.f32 %v1151, %v1237
  %v1245 = vmax.f32 %v1153, %v1239
  %v1246 = vmax.f32 %v1155, %v1241
  %v1247 = vtanh.pop %v1243
  %v1248 = vtanh.pop %v1244
  %v1249 = vtanh.pop %v1245
  %v1250 = vtanh.pop %v1246
  %v1251 = vpack.c.bf16 %v1249, %v1247
  %v1252 = vpack.c.bf16 %v1250, %v1248
  %v1253 = vld [vmem:[%s4] sm:$0xf]
  %v1254 = vld [vmem:[%s4 + $0x4] sm:$0xf]
  %v1255 = vld [vmem:[%s4 + $0x8] sm:$0xf]
  %v1256 = vld [vmem:[%s4 + $0xc] sm:$0xf]
  %v1257 = vld [vmem:[%s4 + $0x10] sm:$0xf]
  %v1258 = vld [vmem:[%s4 + $0x14] sm:$0xf]
  %v1259 = vld [vmem:[%s4 + $0x18] sm:$0xf]
  %v1260 = vld [vmem:[%s4 + $0x1c] sm:$0xf]
  %v1261 = vld [vmem:[%s4 + $0x20] sm:$0xf]
  %v1262 = vld [vmem:[%s4 + $0x24] sm:$0xf]
  %v1263 = vld [vmem:[%s4 + $0x28] sm:$0xf]
  %v1264 = vld [vmem:[%s4 + $0x2c] sm:$0xf]
  %v1265 = vld [vmem:[%s4 + $0x30] sm:$0xf]
  %v1266 = vld [vmem:[%s4 + $0x34] sm:$0xf]
  %v1267 = vld [vmem:[%s4 + $0x38] sm:$0xf]
  %v1268 = vld [vmem:[%s4 + $0x3c] sm:$0xf]
  %v1269 = vld [vmem:[%s4 + $0x40] sm:$0xf]
  %v1270 = vld [vmem:[%s4 + $0x44] sm:$0xf]
  %v1271 = vld [vmem:[%s4 + $0x48] sm:$0xf]
  %v1272 = vld [vmem:[%s4 + $0x4c] sm:$0xf]
  %v1273 = vld [vmem:[%s4 + $0x50] sm:$0xf]
  %v1274 = vld [vmem:[%s4 + $0x54] sm:$0xf]
  %v1275 = vld [vmem:[%s4 + $0x58] sm:$0xf]
  %v1276 = vld [vmem:[%s4 + $0x5c] sm:$0xf]
  %v1277 = vld [vmem:[%s4 + $0x60] sm:$0xf]
  %v1278 = vld [vmem:[%s4 + $0x64] sm:$0xf]
  %v1279 = vld [vmem:[%s4 + $0x68] sm:$0xf]
  %v1280 = vld [vmem:[%s4 + $0x6c] sm:$0xf]
  %v1281 = vld [vmem:[%s4 + $0x70] sm:$0xf]
  %v1282 = vld [vmem:[%s4 + $0x74] sm:$0xf]
  %v1283 = vld [vmem:[%s4 + $0x78] sm:$0xf]
  %v1284 = vld [vmem:[%s4 + $0x7c] sm:$0xf]
  %v1285 = vld [vmem:[%s5] sm:$0x1]
  %v1287 = vlaneseq
  %v1288 = vshrl.u32 %v1287, 7
  %v1289 = vsub.s32 0, %v1288
  %v1290 = vrot.slane %v1285, %v1289
  %v1324 = vunpack.c.l.b16 %v1253
  %v1325 = vunpack.c.l.b16 %v1254
  %v1326 = vunpack.c.l.b16 %v1255
  %v1327 = vunpack.c.l.b16 %v1256
  %v1328 = vunpack.c.l.b16 %v1257
  %v1329 = vunpack.c.l.b16 %v1258
  %v1330 = vunpack.c.l.b16 %v1259
  %v1331 = vunpack.c.l.b16 %v1260
  %v1332 = vunpack.c.l.b16 %v1261
  %v1333 = vunpack.c.l.b16 %v1262
  %v1334 = vunpack.c.l.b16 %v1263
  %v1335 = vunpack.c.l.b16 %v1264
  %v1336 = vunpack.c.l.b16 %v1265
  %v1337 = vunpack.c.l.b16 %v1266
  %v1338 = vunpack.c.l.b16 %v1267
  %v1339 = vunpack.c.l.b16 %v1268
  %v1340 = vunpack.c.l.b16 %v1269
  %v1341 = vunpack.c.l.b16 %v1270
  %v1342 = vunpack.c.l.b16 %v1271
  %v1343 = vunpack.c.l.b16 %v1272
  %v1344 = vunpack.c.l.b16 %v1273
  %v1345 = vunpack.c.l.b16 %v1274
  %v1346 = vunpack.c.l.b16 %v1275
  %v1347 = vunpack.c.l.b16 %v1276
  %v1348 = vunpack.c.l.b16 %v1277
  %v1349 = vunpack.c.l.b16 %v1278
  %v1350 = vunpack.c.l.b16 %v1279
  %v1351 = vunpack.c.l.b16 %v1280
  %v1352 = vunpack.c.l.b16 %v1281
  %v1353 = vunpack.c.l.b16 %v1282
  %v1354 = vunpack.c.l.b16 %v1283
  %v1355 = vunpack.c.l.b16 %v1284
  %v1356 = vpack.c.b16 %v1325, %v1324
  %v1357 = vpack.c.b16 %v1327, %v1326
  %v1358 = vpack.c.b16 %v1329, %v1328
  %v1359 = vpack.c.b16 %v1331, %v1330
  %v1360 = vpack.c.b16 %v1333, %v1332
  %v1361 = vpack.c.b16 %v1335, %v1334
  %v1362 = vpack.c.b16 %v1337, %v1336
  %v1363 = vpack.c.b16 %v1339, %v1338
  %v1364 = vpack.c.b16 %v1341, %v1340
  %v1365 = vpack.c.b16 %v1343, %v1342
  %v1366 = vpack.c.b16 %v1345, %v1344
  %v1367 = vpack.c.b16 %v1347, %v1346
  %v1368 = vpack.c.b16 %v1349, %v1348
  %v1369 = vpack.c.b16 %v1351, %v1350
  %v1370 = vpack.c.b16 %v1353, %v1352
  %v1371 = vpack.c.b16 %v1355, %v1354
  %1388 = vmatprep.subr.bf16.mxu0 0
  %1389 = vmatpush1.bf16.msra.mxu0 %v1363
  %1390 = vmatprep.subr.bf16.mxu0 0
  %1391 = vmatpush1.bf16.msra.mxu0 %v1362
  %1392 = vmatprep.subr.bf16.mxu0 0
  %1393 = vmatpush1.bf16.msra.mxu0 %v1361
  %1394 = vmatprep.subr.bf16.mxu0 0
  %1395 = vmatpush1.bf16.msra.mxu0 %v1360
  %1396 = vmatprep.subr.bf16.mxu0 0
  %1397 = vmatpush1.bf16.msra.mxu0 %v1359
  %1398 = vmatprep.subr.bf16.mxu0 0
  %1399 = vmatpush1.bf16.msra.mxu0 %v1358
  %1400 = vmatprep.subr.bf16.mxu0 0
  %1401 = vmatpush1.bf16.msra.mxu0 %v1357
  %1402 = vmatprep.subr.bf16.mxu0 0
  %1403 = vmatpush1.bf16.msra.mxu0 %v1356
  %1404 = vmatprep.subr.bf16.mxu0 0
  %1405 = vmatpush2.bf16.msra.mxu0 %v1371
  %1406 = vmatprep.subr.bf16.mxu0 0
  %1407 = vmatpush2.bf16.msra.mxu0 %v1370
  %1408 = vmatprep.subr.bf16.mxu0 0
  %1409 = vmatpush2.bf16.msra.mxu0 %v1369
  %1410 = vmatprep.subr.bf16.mxu0 0
  %1411 = vmatpush2.bf16.msra.mxu0 %v1368
  %1412 = vmatprep.subr.bf16.mxu0 0
  %1413 = vmatpush2.bf16.msra.mxu0 %v1367
  %1414 = vmatprep.subr.bf16.mxu0 0
  %1415 = vmatpush2.bf16.msra.mxu0 %v1366
  %1416 = vmatprep.subr.bf16.mxu0 0
  %1417 = vmatpush2.bf16.msra.mxu0 %v1365
  %1418 = vmatprep.subr.bf16.mxu0 0
  %1419 = vmatpush2.bf16.msra.mxu0 %v1364
  %1420 = vmatprep.mubr.bf16.mxu0 %v1252
  %1421 = vmatmul.mubr.bf16.gmra.mxu0 %v1251
  %v1422 = vpop.f32.mrf.mxu0
  %v1423 = vadd.f32 %v1290, %v1422
  %v1424 = vpop.f32.mrf.mxu0
  %v1425 = vpop.f32.mrf.mxu0
  %v1426 = vadd.f32 %v1290, %v1425
  %v1427 = vpop.f32.mrf.mxu0
  %1428 = vdwg.mxu0
  %v1429 = vmax.f32 %v1423, 0.0
  %v1430 = vmax.f32 %v1426, 0.0
  %v1431 = vpack.c.bf16 %v1430, %v1429
  %v1432 = vld [vmem:[%s6] sm:$0xf]
  %v1433 = vld [vmem:[%s6 + $0x4] sm:$0xf]
  %v1434 = vld [vmem:[%s6 + $0x8] sm:$0xf]
  %v1435 = vld [vmem:[%s6 + $0xc] sm:$0xf]
  %v1436 = vld [vmem:[%s6 + $0x10] sm:$0xf]
  %v1437 = vld [vmem:[%s6 + $0x14] sm:$0xf]
  %v1438 = vld [vmem:[%s6 + $0x18] sm:$0xf]
  %v1439 = vld [vmem:[%s6 + $0x1c] sm:$0xf]
  %v1440 = vld [vmem:[%s6 + $0x20] sm:$0xf]
  %v1441 = vld [vmem:[%s6 + $0x24] sm:$0xf]
  %v1442 = vld [vmem:[%s6 + $0x28] sm:$0xf]
  %v1443 = vld [vmem:[%s6 + $0x2c] sm:$0xf]
  %v1444 = vld [vmem:[%s6 + $0x30] sm:$0xf]
  %v1445 = vld [vmem:[%s6 + $0x34] sm:$0xf]
  %v1446 = vld [vmem:[%s6 + $0x38] sm:$0xf]
  %v1447 = vld [vmem:[%s6 + $0x3c] sm:$0xf]
  %v1448 = vld [vmem:[%s7] sm:$0x1]
  %v1450 = vlaneseq
  %v1451 = vshrl.u32 %v1450, 7
  %v1452 = vsub.s32 0, %v1451
  %v1453 = vrot.slane %v1448, %v1452
  %v1471 = vunpack.c.l.b16 %v1432
  %v1472 = vunpack.c.l.b16 %v1433
  %v1473 = vunpack.c.l.b16 %v1434
  %v1474 = vunpack.c.l.b16 %v1435
  %v1475 = vunpack.c.l.b16 %v1436
  %v1476 = vunpack.c.l.b16 %v1437
  %v1477 = vunpack.c.l.b16 %v1438
  %v1478 = vunpack.c.l.b16 %v1439
  %v1479 = vunpack.c.l.b16 %v1440
  %v1480 = vunpack.c.l.b16 %v1441
  %v1481 = vunpack.c.l.b16 %v1442
  %v1482 = vunpack.c.l.b16 %v1443
  %v1483 = vunpack.c.l.b16 %v1444
  %v1484 = vunpack.c.l.b16 %v1445
  %v1485 = vunpack.c.l.b16 %v1446
  %v1486 = vunpack.c.l.b16 %v1447
  %v1487 = vpack.c.b16 %v1472, %v1471
  %v1488 = vpack.c.b16 %v1474, %v1473
  %v1489 = vpack.c.b16 %v1476, %v1475
  %v1490 = vpack.c.b16 %v1478, %v1477
  %v1491 = vpack.c.b16 %v1480, %v1479
  %v1492 = vpack.c.b16 %v1482, %v1481
  %v1493 = vpack.c.b16 %v1484, %v1483
  %v1494 = vpack.c.b16 %v1486, %v1485
  %1503 = vmatprep.subr.bf16.mxu0 0
  %1504 = vmatpush1.bf16.msra.mxu0 %v1494
  %1505 = vmatprep.subr.bf16.mxu0 0
  %1506 = vmatpush1.bf16.msra.mxu0 %v1493
  %1507 = vmatprep.subr.bf16.mxu0 0
  %1508 = vmatpush1.bf16.msra.mxu0 %v1492
  %1509 = vmatprep.subr.bf16.mxu0 0
  %1510 = vmatpush1.bf16.msra.mxu0 %v1491
  %1511 = vmatprep.subr.bf16.mxu0 0
  %1512 = vmatpush1.bf16.msra.mxu0 %v1490
  %1513 = vmatprep.subr.bf16.mxu0 0
  %1514 = vmatpush1.bf16.msra.mxu0 %v1489
  %1515 = vmatprep.subr.bf16.mxu0 0
  %1516 = vmatpush1.bf16.msra.mxu0 %v1488
  %1517 = vmatprep.subr.bf16.mxu0 0
  %1518 = vmatpush1.bf16.msra.mxu0 %v1487
  %1519 = vmatprep.subr.bf16.mxu0 0
  %1520 = vmatpush2.bf16.msra.mxu0 0
  %1521 = vmatprep.subr.bf16.mxu0 0
  %1522 = vmatpush2.bf16.msra.mxu0 0
  %1523 = vmatprep.subr.bf16.mxu0 0
  %1524 = vmatpush2.bf16.msra.mxu0 0
  %1525 = vmatprep.subr.bf16.mxu0 0
  %1526 = vmatpush2.bf16.msra.mxu0 0
  %1527 = vmatprep.subr.bf16.mxu0 0
  %1528 = vmatpush2.bf16.msra.mxu0 0
  %1529 = vmatprep.subr.bf16.mxu0 0
  %1530 = vmatpush2.bf16.msra.mxu0 0
  %1531 = vmatprep.subr.bf16.mxu0 0
  %1532 = vmatpush2.bf16.msra.mxu0 0
  %1533 = vmatprep.subr.bf16.mxu0 0
  %1534 = vmatpush2.bf16.msra.mxu0 0
  %1535 = vmatprep.mubr.bf16.mxu0 0
  %1536 = vmatmul.mubr.bf16.gmra.mxu0 %v1431
  %v1537 = vpop.f32.mrf.mxu0
  %v1538 = vadd.f32 %v1453, %v1537
  %v1539 = vpop.f32.mrf.mxu0
  %v1540 = vpop.f32.mrf.mxu0
  %v1541 = vadd.f32 %v1453, %v1540
  %v1542 = vpop.f32.mrf.mxu0
  %1543 = vdwg.mxu0
  %vm1544 = vcmask 39936
  %v1545 = vsel %vm1544, %v1538, -inf
  %1546 = vmax.xlane.f32.xlu0 %v1545
  %v1547 = vpop.xlane.xlu0 %1546
  %v1548 = vsel %vm1544, %v1541, -inf
  %1549 = vmax.xlane.f32.xlu0 %v1548
  %v1550 = vpop.xlane.xlu0 %1549
  %v1551 = vsub.f32 %v1538, %v1547
  %v1552 = vsub.f32 %v1541, %v1550
  %v1553 = vmul.f32 %v1551, 1.442695
  %v1554 = vpow.pop %v1553
  %v1555 = vmul.f32 %v1552, 1.442695
  %v1556 = vpow.pop %v1555
  %v1557 = vsel %vm1544, %v1554, 0.0
  %1558 = vadd.xlane.f32.xlu0 %v1557
  %v1559 = vpop.xlane.xlu0 %1558
  %v1560 = vsel %vm1544, %v1556, 0.0
  %1561 = vadd.xlane.f32.xlu0 %v1560
  %v1562 = vpop.xlane.xlu0 %1561
  %v1563 = vlog2.pop %v1559
  %v1564 = vmul.f32 %v1563, 0.6931472
  %v1565 = vlog2.pop %v1562
  %v1566 = vmul.f32 %v1565, 0.6931472
  %v1567 = vsub.f32 %v1551, %v1564
  %v1568 = vsub.f32 %v1552, %v1566
  %1569 = vst.msk [vmem:[%s8] sm:$0xff] %vm1544, %v1567
  %1570 = vst.msk [vmem:[%s8 + $0x8] sm:$0xff] %vm1544, %v1568
  // Predicated region
  $region34: #{_lambda_.1} parent=0 // pred_check
    _
  $region35: #{_lambda_.1} parent=0 // pred_check_branch
    %1572 = sbr.rel (0) target = $region37
  $region36: #{_lambda_.1} parent=0 // pred_region
    _
  $region37: #{_lambda_.1} parent=0 // pred_fallthru
    _
  // Predicated region
  $region38: #{_lambda_.1} parent=0 // pred_check
    _
  $region39: #{_lambda_.1} parent=0 // pred_check_branch
    %1574 = sbr.rel (0) target = $region41
  $region40: #{_lambda_.1} parent=0 // pred_region
    _
  $region41: #{_lambda_.1} parent=0 // pred_fallthru
    _

</llo_original>
